<compile_context>
chip_gen: v7x
topology: tpu7x:2x2x1
jax: 0.10.0
libtpu: 0.0.40
codegen_flags: <defaults>
</compile_context>

<pallas_src>
import functools

import numpy as np
import jax
import jax.numpy as jnp
from jax.experimental import pallas as pl
from jax.experimental.pallas import tpu as pltpu


# Row indices inside the packed small-parameter slab (see pack_clear_params).
_ROW_GCN_B, _ROW_GN_S, _ROW_GN_T = 0, 1, 2
_ROW_PRIOR_W, _ROW_PRIOR_B = 3, 4
_ROW_ENC_U, _ROW_ENC_Y, _ROW_ENC_B = 5, 6, 7
_ROW_DEC1_U, _ROW_DEC1_Y, _ROW_DEC1_B = 8, 9, 10
_ROW_DEC2_B = 11
_NUM_PVEC_ROWS = 12


def _round_up(x, m):
    return ((x + m - 1) // m) * m


# ----------------------------------------------------------------------------
# Kernel 1: preamble (GCN -> pooling -> norm -> prior/encoder -> decoder hidden)
# ----------------------------------------------------------------------------
def clear_preamble_kernel(feat_ref, adj_ref, uy_ref, gcn_w_ref, enc_w_ref,
                          dec1_w_ref, dec2_w_ref, pvec_ref,
                          zout_ref, h_ref, *, H, Z):
    feat = feat_ref[...]                 # (B, N, F)
    adj = adj_ref[...]                   # (B, N, N)
    B, N, F = feat.shape
    u = uy_ref[:, 0:1]                   # (B, 1)
    ycf = uy_ref[:, 1:2]                 # (B, 1)

    def prow(i, w):                      # (1, w) row of the packed small params
        return pvec_ref[i:i + 1, :w]

    # DenseGCNConv with diag(adj) := 1, without keeping a second (B,N,N) array
    # (adj_sl / adj_norm) live through the batched matmul:
    #   deg_i = rowsum(adj)_i - adj_ii + 1
    #   prop  = adj @ (xw*dinv) + (1 - adj_ii) * (xw*dinv)_i
    row = jax.lax.broadcasted_iota(jnp.int32, (N, N), 0)
    col = jax.lax.broadcasted_iota(jnp.int32, (N, N), 1)
    eye = (row == col).astype(jnp.float32)                         # transient (N,N)
    diag = jnp.sum(adj * eye[None, :, :], axis=-1, keepdims=True)  # (B, N, 1)
    deg = jnp.sum(adj, axis=-1, keepdims=True) - diag + 1.0
    dinv = jax.lax.rsqrt(jnp.maximum(deg, 1.0))
    xw = jnp.dot(feat.reshape(B * N, F), gcn_w_ref[...],
                 preferred_element_type=jnp.float32).reshape(B, N, H)
    y = xw * dinv
    prop = jnp.einsum('bij,bjh->bih', adj, y,
                      preferred_element_type=jnp.float32) + (1.0 - diag) * y
    gcn = prop * dinv + prow(_ROW_GCN_B, H)                        # (B, N, H)

    # graph pooling: reference 'mean' branch is torch.sum (intentional).
    pooled = jnp.sum(gcn, axis=1)                                  # (B, H)
    # graph_norm: eval-mode BatchNorm1d folded to an affine.
    grep = pooled * prow(_ROW_GN_S, H) + prow(_ROW_GN_T, H)

    # Prior mean|logvar, fused Linear(1 -> 2Z).
    pri = u * prow(_ROW_PRIOR_W, 2 * Z) + prow(_ROW_PRIOR_B, 2 * Z)
    z_u_mu = pri[:, :Z]
    z_u_logvar = jax.nn.sigmoid(pri[:, Z:])

    # Encoder mean|var, fused: Linear(cat(grep,u,ycf) -> 2Z) [+BN folded].
    enc = (jnp.dot(grep, enc_w_ref[...], preferred_element_type=jnp.float32)
           + u * prow(_ROW_ENC_U, 2 * Z) + ycf * prow(_ROW_ENC_Y, 2 * Z)
           + prow(_ROW_ENC_B, 2 * Z))
    z_mu = jnp.maximum(enc[:, :Z], 0.0)
    z_logvar = jax.nn.sigmoid(jnp.maximum(enc[:, Z:], 0.0))

    # Reparametrize (eval mode): z = z_mu.
    z = z_mu

    # Decoder_x / decoder_a hidden layers, fused (x-half | a-half).
    h1 = jnp.maximum(
        jnp.dot(z, dec1_w_ref[...], preferred_element_type=jnp.float32)
        + u * prow(_ROW_DEC1_U, 2 * H) + ycf * prow(_ROW_DEC1_Y, 2 * H)
        + prow(_ROW_DEC1_B, 2 * H), 0.0)                           # (B, 2H)
    h2 = jnp.maximum(
        jnp.dot(h1, dec2_w_ref[...], preferred_element_type=jnp.float32)
        + prow(_ROW_DEC2_B, 2 * H), 0.0)                           # (B, 2H)=[hx|ha]

    # Lane-dense latent slab: [z_mu | z_logvar | z_u_mu | z_u_logvar | 0-pad].
    zpad = zout_ref.shape[1] - 4 * Z
    pieces = [z_mu, z_logvar, z_u_mu, z_u_logvar]
    if zpad > 0:
        pieces.append(jnp.zeros((B, zpad), jnp.float32))
    zout_ref[...] = jnp.concatenate(pieces, axis=1)

    # Hidden slab for the head kernel, cast ONCE to the head compute dtype.
    hpad = h_ref.shape[1] - 2 * H
    hv = h2 if hpad == 0 else jnp.concatenate(
        [h2, jnp.zeros((B, hpad), jnp.float32)], axis=1)
    h_ref[...] = hv.astype(h_ref.dtype)


# ----------------------------------------------------------------------------
# Kernel 2: column-tiled fused big heads (decoder_x / decoder_a final Linear)
# ----------------------------------------------------------------------------
def clear_head_kernel(h_ref, w_ref, b_ref, out_ref, *, H, n_fx_tiles):
    j = pl.program_id(0)
    h = h_ref[...]                       # (B, h_slab_w) in head dtype

    @pl.when(j < n_fx_tiles)             # features_reconst columns: no sigmoid
    def _():
        out_ref[...] = (jnp.dot(h[:, :H], w_ref[...],
                                preferred_element_type=jnp.float32) + b_ref[...])

    @pl.when(j >= n_fx_tiles)            # adj_reconst columns: sigmoid (f32)
    def _():
        pre = (jnp.dot(h[:, H:2 * H], w_ref[...],
                       preferred_element_type=jnp.float32) + b_ref[...])
        out_ref[...] = jax.nn.sigmoid(pre)


# ----------------------------------------------------------------------------
# Parameter packing (run ONCE at parameter-load time, not per forward)
# ----------------------------------------------------------------------------
def _pack_small_params(params, H, Z):
    em_w, ev_w = params['em_w'], params['ev_w']          # (H+2, Z), BN folded
    dx_w1, da_w1 = params['dx_w1'], params['da_w1']      # (Z+1, H), (Z+2, H)

    enc_w = jnp.concatenate([em_w[:H], ev_w[:H]], axis=1)                   # (H, 2Z)
    enc_u = jnp.concatenate([em_w[H:H + 1], ev_w[H:H + 1]], axis=1)         # (1, 2Z)
    enc_y = jnp.concatenate([em_w[H + 1:H + 2], ev_w[H + 1:H + 2]], axis=1)
    enc_b = jnp.concatenate([params['em_b'], params['ev_b']], axis=1)

    prior_w = jnp.concatenate([params['pm_w'], params['pv_w']], axis=1)     # (1, 2Z)
    prior_b = jnp.concatenate([params['pm_b'], params['pv_b']], axis=1)

    dec1_w = jnp.concatenate([dx_w1[:Z], da_w1[:Z]], axis=1)                # (Z, 2H)
    dec1_u = jnp.concatenate([jnp.zeros((1, H), jnp.float32),
                              da_w1[Z:Z + 1]], axis=1)                      # x-half: no u
    dec1_y = jnp.concatenate([dx_w1[Z:Z + 1], da_w1[Z + 1:Z + 2]], axis=1)
    dec1_b = jnp.concatenate([params['dx_b1'], params['da_b1']], axis=1)

    zero_hh = jnp.zeros((H, H), jnp.float32)
    dec2_w = jnp.concatenate([                                              # block-diag (2H,2H)
        jnp.concatenate([params['dx_w2'], zero_hh], axis=1),
        jnp.concatenate([zero_hh, params['da_w2']], axis=1)], axis=0)
    dec2_b = jnp.concatenate([params['dx_b2'], params['da_b2']], axis=1)

    pvec_w = _round_up(max(H, 2 * Z, 2 * H), 128)

    def row(v):
        return jnp.pad(v.astype(jnp.float32), ((0, 0), (0, pvec_w - v.shape[1])))

    pvec = jnp.concatenate([
        row(params['gcn_b']), row(params['gn_s']), row(params['gn_t']),
        row(prior_w), row(prior_b),
        row(enc_u), row(enc_y), row(enc_b),
        row(dec1_u), row(dec1_y), row(dec1_b),
        row(dec2_b)], axis=0)                                               # (12, pvec_w)
    return enc_w, dec1_w, dec2_w, pvec


def _pick_tile(H, NF, NN, head_itemsize, tile=None):
    """Head tile width: ~2 MiB of streamed weight per block, clamped."""
    if tile is None:
        t = (2 * 1024 * 1024) // max(H * head_itemsize, 1)
        t = max(512, min(int(t), 4096))
        t = (t // 128) * 128
        t = min(t, _round_up(max(NF, NN), 128))   # don't over-pad tiny heads
        t = max(t, 128)
    else:
        assert tile % 128 == 0
        t = tile
    return t


def pack_clear_params(params, n_nodes, feature_dim, *, tile=None,
                      head_dtype=jnp.bfloat16):
    """Fuse / pad all CLEAR parameters once (hoisted out of the hot path)."""
    H = params['gcn_w'].shape[1]
    Z = params['em_w'].shape[1]
    N, F = int(n_nodes), int(feature_dim)
    NF, NN = N * F, N * N
    head_itemsize = jnp.dtype(head_dtype).itemsize
    tile = _pick_tile(H, NF, NN, head_itemsize, tile)
    c_fx = _round_up(NF, tile)
    c_fa = _round_up(NN, tile)

    enc_w, dec1_w, dec2_w, pvec = _pack_small_params(params, H, Z)

    # Big output heads fused into one lane-dense, zero-padded column slab.
    w3 = jnp.zeros((H, c_fx + c_fa), jnp.float32)
    w3 = w3.at[:, :NF].set(params['dx_w3'])
    w3 = w3.at[:, c_fx:c_fx + NN].set(params['da_w3'])
    w3 = w3.astype(head_dtype)
    b3 = jnp.zeros((1, c_fx + c_fa), jnp.float32)
    b3 = b3.at[:, :NF].set(params['dx_b3'])
    b3 = b3.at[:, c_fx:c_fx + NN].set(params['da_b3'])

    return {
        'gcn_w': params['gcn_w'].astype(jnp.float32),
        'enc_w': enc_w, 'dec1_w': dec1_w, 'dec2_w': dec2_w, 'pvec': pvec,
        'w3': w3, 'b3': b3,
        'meta': dict(H=int(H), Z=int(Z), N=N, F=F, NF=NF, NN=NN, tile=int(tile),
                     c_fx=int(c_fx), c_fa=int(c_fa),
                     n_fx_tiles=int(c_fx // tile)),
    }


# ----------------------------------------------------------------------------
# Forward
# ----------------------------------------------------------------------------
def clear_forward(packed, features, u, adj, y_cf):
    """Eval-mode CLEAR forward from pre-packed parameters (pack_clear_params)."""
    meta = packed['meta']
    B, N, F = features.shape
    assert N == meta['N'] and F == meta['F']
    H, Z = meta['H'], meta['Z']
    tile, c_fx, c_fa = meta['tile'], meta['c_fx'], meta['c_fa']
    n_fx_tiles = meta['n_fx_tiles']
    n_tiles = (c_fx + c_fa) // tile
    NF, NN = meta['NF'], meta['NN']
    head_dtype = packed['w3'].dtype
    head_itemsize = jnp.dtype(head_dtype).itemsize
    z_out_w = _round_up(4 * Z, 128)
    h_slab_w = _round_up(2 * H, 128)

    uy = jnp.concatenate([u, y_cf], axis=1).astype(jnp.float32)             # (B, 2)

    # ---- call 1: preamble (runs once, everything resident in VMEM once) -----
    pre_bytes = 4 * (B * N * F + 3 * B * N * N + 4 * B * N * H
                     + F * H + 2 * H * Z + 2 * Z * H + 4 * H * H
                     + _NUM_PVEC_ROWS * packed['pvec'].shape[1]
                     + B * (z_out_w + h_slab_w))
    pre_vmem = int(min(max(2 * pre_bytes, 32 << 20), 128 << 20))
    zout, h_slab = pl.pallas_call(
        functools.partial(clear_preamble_kernel, H=H, Z=Z),
        out_shape=(
            jax.ShapeDtypeStruct((B, z_out_w), jnp.float32),   # latent slab
            jax.ShapeDtypeStruct((B, h_slab_w), head_dtype),   # [hx | ha] slab
        ),
        compiler_params=pltpu.CompilerParams(vmem_limit_bytes=pre_vmem),
        cost_estimate=pl.CostEstimate(
            flops=int(2 * B * (N * F * H + N * N * H + 2 * H * Z
                               + 2 * Z * H + 4 * H * H)),
            transcendentals=int(2 * B * Z),
            bytes_accessed=int(pre_bytes)),
    )(features.astype(jnp.float32), adj.astype(jnp.float32), uy,
      packed['gcn_w'], packed['enc_w'], packed['dec1_w'], packed['dec2_w'],
      packed['pvec'])

    # ---- call 2: column-tiled fused heads (dominant, HBM-bound stream) ------
    head_bufs = (2 * H * tile * head_itemsize      # w3 tiles (double-buffered)
                 + 2 * tile * 4                    # b3 tiles
                 + 2 * B * tile * 4                # output tiles
                 + 2 * B * h_slab_w * head_itemsize)
    head_vmem = int(min(max(2 * head_bufs + (4 << 20), 32 << 20), 128 << 20))
    head = pl.pallas_call(
        functools.partial(clear_head_kernel, H=H, n_fx_tiles=n_fx_tiles),
        grid=(n_tiles,),
        in_specs=[
            pl.BlockSpec((B, h_slab_w), lambda j: (0, 0)),       # hidden slab
            pl.BlockSpec((H, tile), lambda j: (0, j)),           # w3 column tile
            pl.BlockSpec((1, tile), lambda j: (0, j)),           # b3 column tile
        ],
        out_shape=jax.ShapeDtypeStruct((B, c_fx + c_fa), jnp.float32),
        out_specs=pl.BlockSpec((B, tile), lambda j: (0, j)),
        compiler_params=pltpu.CompilerParams(
            dimension_semantics=("parallel",),     # tiles are independent -> megacore
            vmem_limit_bytes=head_vmem),
        cost_estimate=pl.CostEstimate(
            flops=int(2 * B * H * (c_fx + c_fa)),
            transcendentals=int(B * c_fa),
            bytes_accessed=int(H * (c_fx + c_fa) * head_itemsize
                               + (c_fx + c_fa) * 4 + B * (c_fx + c_fa) * 4
                               + B * h_slab_w * head_itemsize)),
    )(h_slab, packed['w3'], packed['b3'])

    z_mu = zout[:, :Z]
    z_logvar = zout[:, Z:2 * Z]
    z_u_mu = zout[:, 2 * Z:3 * Z]
    z_u_logvar = zout[:, 3 * Z:4 * Z]
    fx = head[:, :NF].reshape(B, N, F)
    fa = head[:, c_fx:c_fx + NN].reshape(B, N, N)

    return {
        'z_mu': z_mu,
        'z_logvar': z_logvar,
        'adj_permuted': adj,
        'features_permuted': features,
        'adj_reconst': fa,
        'features_reconst': fx,
        'z_u_mu': z_u_mu,
        'z_u_logvar': z_u_logvar,
    }


# ----------------------------------------------------------------------------
# Parameter init (matches the PyTorch module at construction, eval mode)
# ----------------------------------------------------------------------------
def init_params(key, feature_dim, h_dim, z_dim, n_nodes):
    ks = jax.random.split(key, 16)

    def linear(k, fan_in, fan_out):
        k1, k2 = jax.random.split(k)
        bound = 1.0 / jnp.sqrt(jnp.float32(fan_in))
        w = jax.random.uniform(k1, (fan_in, fan_out), jnp.float32, -bound, bound)
        b = jax.random.uniform(k2, (1, fan_out), jnp.float32, -bound, bound)
        return w, b

    eps = 1e-5
    # Eval-mode BatchNorm1d at init: gamma=1, beta=0, running_mean=0, running_var=1.
    # NOTE: loading trained BN stats requires re-deriving these folded params.
    bn_scale = 1.0 / jnp.sqrt(1.0 + eps)

    p = {}
    p['gcn_w'], p['gcn_b'] = linear(ks[0], feature_dim, h_dim)
    p['gn_s'] = jnp.full((1, h_dim), bn_scale, jnp.float32)
    p['gn_t'] = jnp.zeros((1, h_dim), jnp.float32)

    p['pm_w'], p['pm_b'] = linear(ks[1], 1, z_dim)
    p['pv_w'], p['pv_b'] = linear(ks[2], 1, z_dim)

    w, b = linear(ks[3], h_dim + 2, z_dim)
    p['em_w'], p['em_b'] = w * bn_scale, b * bn_scale          # Linear + BN folded
    w, b = linear(ks[4], h_dim + 2, z_dim)
    p['ev_w'], p['ev_b'] = w * bn_scale, b * bn_scale

    w, b = linear(ks[5], z_dim + 1, h_dim)
    p['dx_w1'], p['dx_b1'] = w * bn_scale, b * bn_scale
    w, b = linear(ks[6], h_dim, h_dim)
    p['dx_w2'], p['dx_b2'] = w * bn_scale, b * bn_scale
    p['dx_w3'], p['dx_b3'] = linear(ks[7], h_dim, n_nodes * feature_dim)

    w, b = linear(ks[8], z_dim + 2, h_dim)
    p['da_w1'], p['da_b1'] = w * bn_scale, b * bn_scale
    w, b = linear(ks[9], h_dim, h_dim)
    p['da_w2'], p['da_b2'] = w * bn_scale, b * bn_scale
    p['da_w3'], p['da_b3'] = linear(ks[10], h_dim, n_nodes * n_nodes)
    return p


# ----------------------------------------------------------------------------
# Pure-JAX reference (eval mode, BN folded) for validation
# ----------------------------------------------------------------------------
def clear_reference(params, features, u, adj, y_cf):
    B, N, F = features.shape
    eye = jnp.eye(N, dtype=jnp.float32)
    adj_sl = jnp.where(eye[None] > 0, 1.0, adj)
    deg = jnp.maximum(jnp.sum(adj_sl, axis=-1), 1.0)
    dinv = deg ** -0.5
    adj_norm = dinv[:, :, None] * adj_sl * dinv[:, None, :]
    xw = jnp.einsum('bnf,fh->bnh', features, params['gcn_w'])
    gcn = jnp.einsum('bij,bjh->bih', adj_norm, xw) + params['gcn_b']
    pooled = jnp.sum(gcn, axis=1)                      # 'mean' branch == sum (quirk)
    grep = pooled * params['gn_s'] + params['gn_t']
    cat = jnp.concatenate([grep, u, y_cf], axis=1)
    z_mu = jax.nn.relu(cat @ params['em_w'] + params['em_b'])
    z_logvar = jax.nn.sigmoid(jax.nn.relu(cat @ params['ev_w'] + params['ev_b']))
    z_u_mu = u @ params['pm_w'] + params['pm_b']
    z_u_logvar = jax.nn.sigmoid(u @ params['pv_w'] + params['pv_b'])
    z = z_mu                                           # eval-mode reparametrize
    hx = jax.nn.relu(jnp.concatenate([z, y_cf], 1) @ params['dx_w1'] + params['dx_b1'])
    hx = jax.nn.relu(hx @ params['dx_w2'] + params['dx_b2'])
    fx = (hx @ params['dx_w3'] + params['dx_b3']).reshape(B, N, F)
    ha = jax.nn.relu(jnp.concatenate([z, u, y_cf], 1) @ params['da_w1'] + params['da_b1'])
    ha = jax.nn.relu(ha @ params['da_w2'] + params['da_b2'])
    fa = jax.nn.sigmoid(ha @ params['da_w3'] + params['da_b3']).reshape(B, N, N)
    return dict(z_mu=z_mu, z_logvar=z_logvar, z_u_mu=z_u_mu, z_u_logvar=z_u_logvar,
                features_reconst=fx, adj_reconst=fa)


if __name__ == "__main__":
    key = jax.random.PRNGKey(0)
    B, N, F, H, Z = 4, 10, 8, 16, 16   # batch, n_nodes, feature_dim, h_dim, z_dim

    kp, kf, ka, ku, ky = jax.random.split(key, 5)
    params = init_params(kp, F, H, Z, N)

    features = jax.random.normal(kf, (B, N, F), jnp.float32)
    a = (jax.random.uniform(ka, (B, N, N)) > 0.5).astype(jnp.float32)
    adj = jnp.maximum(a, jnp.swapaxes(a, 1, 2))          # symmetric 0/1 adjacency
    adj = adj * (1.0 - jnp.eye(N, dtype=jnp.float32)[None])
    u = jax.random.normal(ku, (B, 1), jnp.float32)
    y_cf = (jax.random.uniform(ky, (B, 1)) > 0.5).astype(jnp.float32)

    # f32 validation path (head_dtype=float32) against the pure-JAX reference.
    packed_f32 = pack_clear_params(params, N, F, head_dtype=jnp.float32)
    out_f32 = clear_forward(packed_f32, features, u, adj, y_cf)
    jax.block_until_ready(out_f32)
    with jax.default_matmul_precision("float32"):
        ref = clear_reference(params, features, u, adj, y_cf)
    for k in ('z_mu', 'z_logvar', 'z_u_mu', 'z_u_logvar',
              'features_reconst', 'adj_reconst'):
        np.testing.assert_allclose(np.asarray(out_f32[k]), np.asarray(ref[k]),
                                   rtol=2e-2, atol=2e-2)

    # Production path: bf16 head weights (default), packed once, forward reused.
    packed = pack_clear_params(params, N, F)             # head_dtype=bfloat16
    out = clear_forward(packed, features, u, adj, y_cf)
    jax.block_until_ready(out)

    assert out['z_mu'].shape == (B, Z)
    assert out['z_logvar'].shape == (B, Z)
    assert out['z_u_mu'].shape == (B, Z)
    assert out['z_u_logvar'].shape == (B, Z)
    assert out['adj_reconst'].shape == (B, N, N)
    assert out['features_reconst'].shape == (B, N, F)
    assert bool(jnp.all(jnp.isfinite(out['adj_reconst'])))
    assert bool(jnp.all(jnp.isfinite(out['features_reconst'])))
    print("KERNEL_OK")
</pallas_src>

<mosaic_0001>
module attributes {stable_mosaic.version = 11 : i64} {
  func.func @clear_preamble_kernel(%arg0: memref<4x10x8xf32, #tpu.memory_space<vmem>>, %arg1: memref<4x10x10xf32, #tpu.memory_space<vmem>>, %arg2: memref<4x2xf32, #tpu.memory_space<vmem>>, %arg3: memref<8x16xf32, #tpu.memory_space<vmem>>, %arg4: memref<16x32xf32, #tpu.memory_space<vmem>>, %arg5: memref<16x32xf32, #tpu.memory_space<vmem>>, %arg6: memref<32x32xf32, #tpu.memory_space<vmem>>, %arg7: memref<12x128xf32, #tpu.memory_space<vmem>>, %arg8: memref<4x128xf32, #tpu.memory_space<vmem>>, %arg9: memref<4x128xf32, #tpu.memory_space<vmem>>) attributes {dimension_semantics = [], scalar_prefetch = 0 : i64, scratch_operands = 0 : i64, tpu.core_type = #tpu.core_type<tc>} {
    %c0 = arith.constant 0 : index
    %c0_0 = arith.constant 0 : index
    %c0_1 = arith.constant 0 : index
    %0 = vector.load %arg0[%c0, %c0_0, %c0_1] : memref<4x10x8xf32, #tpu.memory_space<vmem>>, vector<4x10x8xf32>
    %c0_2 = arith.constant 0 : index
    %c0_3 = arith.constant 0 : index
    %c0_4 = arith.constant 0 : index
    %1 = vector.load %arg1[%c0_2, %c0_3, %c0_4] : memref<4x10x10xf32, #tpu.memory_space<vmem>>, vector<4x10x10xf32>
    %c0_5 = arith.constant 0 : index
    %c0_6 = arith.constant 0 : index
    %2 = vector.load %arg2[%c0_5, %c0_6] : memref<4x2xf32, #tpu.memory_space<vmem>>, vector<4x1xf32>
    %c0_7 = arith.constant 0 : index
    %c1 = arith.constant 1 : index
    %3 = vector.load %arg2[%c0_7, %c1] : memref<4x2xf32, #tpu.memory_space<vmem>>, vector<4x1xf32>
    %4 = tpu.iota {dimensions = array<i32: 0>} : vector<10x10xi32>
    %5 = tpu.iota {dimensions = array<i32: 1>} : vector<10x10xi32>
    %6 = arith.cmpi eq, %4, %5 : vector<10x10xi32>
    %7 = arith.extui %6 : vector<10x10xi1> to vector<10x10xi32>
    %8 = arith.sitofp %7 : vector<10x10xi32> to vector<10x10xf32>
    %9 = vector.shape_cast %8 : vector<10x10xf32> to vector<1x10x10xf32>
    %10 = vector.broadcast %9 : vector<1x10x10xf32> to vector<4x10x10xf32>
    %11 = arith.mulf %1, %10 : vector<4x10x10xf32>
    %cst = arith.constant dense<0.000000e+00> : vector<4x10xf32>
    %12 = vector.multi_reduction <add>, %11, %cst [2] : vector<4x10x10xf32> to vector<4x10xf32>
    %13 = vector.shape_cast %12 : vector<4x10xf32> to vector<4x10x1xf32>
    %cst_8 = arith.constant dense<0.000000e+00> : vector<4x10xf32>
    %14 = vector.multi_reduction <add>, %1, %cst_8 [2] : vector<4x10x10xf32> to vector<4x10xf32>
    %15 = vector.shape_cast %14 : vector<4x10xf32> to vector<4x10x1xf32>
    %16 = arith.subf %15, %13 : vector<4x10x1xf32>
    %cst_9 = arith.constant 1.000000e+00 : f32
    %17 = vector.broadcast %cst_9 : f32 to vector<4x10x1xf32>
    %18 = arith.addf %16, %17 : vector<4x10x1xf32>
    %cst_10 = arith.constant 1.000000e+00 : f32
    %19 = vector.broadcast %cst_10 : f32 to vector<4x10x1xf32>
    %20 = arith.maximumf %18, %19 : vector<4x10x1xf32>
    %21 = math.rsqrt %20 : vector<4x10x1xf32>
    %22 = vector.shape_cast %0 : vector<4x10x8xf32> to vector<40x8xf32>
    %c0_11 = arith.constant 0 : index
    %c0_12 = arith.constant 0 : index
    %23 = vector.load %arg3[%c0_11, %c0_12] : memref<8x16xf32, #tpu.memory_space<vmem>>, vector<8x16xf32>
    %cst_13 = arith.constant dense<0.000000e+00> : vector<40x16xf32>
    %24 = tpu.matmul %22, %23, %cst_13 {dimension_numbers = #tpu.dot_dimension_numbers<[1], [0], [0], [1], [0, 0, 1, 1], [], []>} : vector<40x8xf32>, vector<8x16xf32>, vector<40x16xf32> -> vector<40x16xf32>
    %25 = vector.shape_cast %24 : vector<40x16xf32> to vector<4x10x16xf32>
    %26 = vector.broadcast %21 : vector<4x10x1xf32> to vector<4x10x16xf32>
    %27 = arith.mulf %25, %26 : vector<4x10x16xf32>
    "tpu.trace_start"() <{level = 10 : i32, message = "bij,bjh->bih"}> : () -> ()
    %cst_14 = arith.constant dense<0.000000e+00> : vector<4x10x16xf32>
    %28 = tpu.matmul %1, %27, %cst_14 {dimension_numbers = #tpu.dot_dimension_numbers<[2], [1], [1], [2], [0, 0, 0, 1, 1, 2], [0], [0]>} : vector<4x10x10xf32>, vector<4x10x16xf32>, vector<4x10x16xf32> -> vector<4x10x16xf32>
    "tpu.trace_stop"() : () -> ()
    %cst_15 = arith.constant 1.000000e+00 : f32
    %29 = vector.broadcast %cst_15 : f32 to vector<4x10x1xf32>
    %30 = arith.subf %29, %13 : vector<4x10x1xf32>
    %31 = vector.broadcast %30 : vector<4x10x1xf32> to vector<4x10x16xf32>
    %32 = arith.mulf %31, %27 : vector<4x10x16xf32>
    %33 = arith.addf %28, %32 : vector<4x10x16xf32>
    %34 = vector.broadcast %21 : vector<4x10x1xf32> to vector<4x10x16xf32>
    %35 = arith.mulf %33, %34 : vector<4x10x16xf32>
    %c0_16 = arith.constant 0 : index
    %c0_17 = arith.constant 0 : index
    %36 = vector.load %arg7[%c0_16, %c0_17] : memref<12x128xf32, #tpu.memory_space<vmem>>, vector<1x16xf32>
    %37 = vector.shape_cast %36 : vector<1x16xf32> to vector<1x1x16xf32>
    %38 = vector.broadcast %37 : vector<1x1x16xf32> to vector<4x10x16xf32>
    %39 = arith.addf %35, %38 : vector<4x10x16xf32>
    %cst_18 = arith.constant dense<0.000000e+00> : vector<4x16xf32>
    %40 = vector.multi_reduction <add>, %39, %cst_18 [1] : vector<4x10x16xf32> to vector<4x16xf32>
    %c1_19 = arith.constant 1 : index
    %c0_20 = arith.constant 0 : index
    %41 = vector.load %arg7[%c1_19, %c0_20] : memref<12x128xf32, #tpu.memory_space<vmem>>, vector<1x16xf32>
    %42 = vector.broadcast %41 : vector<1x16xf32> to vector<4x16xf32>
    %43 = arith.mulf %40, %42 : vector<4x16xf32>
    %c2 = arith.constant 2 : index
    %c0_21 = arith.constant 0 : index
    %44 = vector.load %arg7[%c2, %c0_21] : memref<12x128xf32, #tpu.memory_space<vmem>>, vector<1x16xf32>
    %45 = vector.broadcast %44 : vector<1x16xf32> to vector<4x16xf32>
    %46 = arith.addf %43, %45 : vector<4x16xf32>
    %c3 = arith.constant 3 : index
    %c0_22 = arith.constant 0 : index
    %47 = vector.load %arg7[%c3, %c0_22] : memref<12x128xf32, #tpu.memory_space<vmem>>, vector<1x32xf32>
    %48 = vector.broadcast %2 : vector<4x1xf32> to vector<4x32xf32>
    %49 = vector.broadcast %47 : vector<1x32xf32> to vector<4x32xf32>
    %50 = arith.mulf %48, %49 : vector<4x32xf32>
    %c4 = arith.constant 4 : index
    %c0_23 = arith.constant 0 : index
    %51 = vector.load %arg7[%c4, %c0_23] : memref<12x128xf32, #tpu.memory_space<vmem>>, vector<1x32xf32>
    %52 = vector.broadcast %51 : vector<1x32xf32> to vector<4x32xf32>
    %53 = arith.addf %50, %52 : vector<4x32xf32>
    %54 = vector.extract_strided_slice %53 {offsets = [0, 0], sizes = [4, 16], strides = [1, 1]} : vector<4x32xf32> to vector<4x16xf32>
    %55 = vector.extract_strided_slice %53 {offsets = [0, 16], sizes = [4, 16], strides = [1, 1]} : vector<4x32xf32> to vector<4x16xf32>
    %56 = arith.negf %55 : vector<4x16xf32>
    %57 = math.exp %56 : vector<4x16xf32>
    %cst_24 = arith.constant 1.000000e+00 : f32
    %58 = vector.broadcast %cst_24 : f32 to vector<4x16xf32>
    %59 = arith.addf %58, %57 : vector<4x16xf32>
    %60 = arith.divf %58, %59 : vector<4x16xf32>
    %c0_25 = arith.constant 0 : index
    %c0_26 = arith.constant 0 : index
    %61 = vector.load %arg4[%c0_25, %c0_26] : memref<16x32xf32, #tpu.memory_space<vmem>>, vector<16x32xf32>
    %cst_27 = arith.constant dense<0.000000e+00> : vector<4x32xf32>
    %62 = tpu.matmul %46, %61, %cst_27 {dimension_numbers = #tpu.dot_dimension_numbers<[1], [0], [0], [1], [0, 0, 1, 1], [], []>} : vector<4x16xf32>, vector<16x32xf32>, vector<4x32xf32> -> vector<4x32xf32>
    %c5 = arith.constant 5 : index
    %c0_28 = arith.constant 0 : index
    %63 = vector.load %arg7[%c5, %c0_28] : memref<12x128xf32, #tpu.memory_space<vmem>>, vector<1x32xf32>
    %64 = vector.broadcast %2 : vector<4x1xf32> to vector<4x32xf32>
    %65 = vector.broadcast %63 : vector<1x32xf32> to vector<4x32xf32>
    %66 = arith.mulf %64, %65 : vector<4x32xf32>
    %67 = arith.addf %62, %66 : vector<4x32xf32>
    %c6 = arith.constant 6 : index
    %c0_29 = arith.constant 0 : index
    %68 = vector.load %arg7[%c6, %c0_29] : memref<12x128xf32, #tpu.memory_space<vmem>>, vector<1x32xf32>
    %69 = vector.broadcast %3 : vector<4x1xf32> to vector<4x32xf32>
    %70 = vector.broadcast %68 : vector<1x32xf32> to vector<4x32xf32>
    %71 = arith.mulf %69, %70 : vector<4x32xf32>
    %72 = arith.addf %67, %71 : vector<4x32xf32>
    %c7 = arith.constant 7 : index
    %c0_30 = arith.constant 0 : index
    %73 = vector.load %arg7[%c7, %c0_30] : memref<12x128xf32, #tpu.memory_space<vmem>>, vector<1x32xf32>
    %74 = vector.broadcast %73 : vector<1x32xf32> to vector<4x32xf32>
    %75 = arith.addf %72, %74 : vector<4x32xf32>
    %76 = vector.extract_strided_slice %75 {offsets = [0, 0], sizes = [4, 16], strides = [1, 1]} : vector<4x32xf32> to vector<4x16xf32>
    %cst_31 = arith.constant 0.000000e+00 : f32
    %77 = vector.broadcast %cst_31 : f32 to vector<4x16xf32>
    %78 = arith.maximumf %76, %77 : vector<4x16xf32>
    %79 = vector.extract_strided_slice %75 {offsets = [0, 16], sizes = [4, 16], strides = [1, 1]} : vector<4x32xf32> to vector<4x16xf32>
    %cst_32 = arith.constant 0.000000e+00 : f32
    %80 = vector.broadcast %cst_32 : f32 to vector<4x16xf32>
    %81 = arith.maximumf %79, %80 : vector<4x16xf32>
    %82 = arith.negf %81 : vector<4x16xf32>
    %83 = math.exp %82 : vector<4x16xf32>
    %cst_33 = arith.constant 1.000000e+00 : f32
    %84 = vector.broadcast %cst_33 : f32 to vector<4x16xf32>
    %85 = arith.addf %84, %83 : vector<4x16xf32>
    %86 = arith.divf %84, %85 : vector<4x16xf32>
    %c0_34 = arith.constant 0 : index
    %c0_35 = arith.constant 0 : index
    %87 = vector.load %arg5[%c0_34, %c0_35] : memref<16x32xf32, #tpu.memory_space<vmem>>, vector<16x32xf32>
    %cst_36 = arith.constant dense<0.000000e+00> : vector<4x32xf32>
    %88 = tpu.matmul %78, %87, %cst_36 {dimension_numbers = #tpu.dot_dimension_numbers<[1], [0], [0], [1], [0, 0, 1, 1], [], []>} : vector<4x16xf32>, vector<16x32xf32>, vector<4x32xf32> -> vector<4x32xf32>
    %c8 = arith.constant 8 : index
    %c0_37 = arith.constant 0 : index
    %89 = vector.load %arg7[%c8, %c0_37] : memref<12x128xf32, #tpu.memory_space<vmem>>, vector<1x32xf32>
    %90 = vector.broadcast %2 : vector<4x1xf32> to vector<4x32xf32>
    %91 = vector.broadcast %89 : vector<1x32xf32> to vector<4x32xf32>
    %92 = arith.mulf %90, %91 : vector<4x32xf32>
    %93 = arith.addf %88, %92 : vector<4x32xf32>
    %c9 = arith.constant 9 : index
    %c0_38 = arith.constant 0 : index
    %94 = vector.load %arg7[%c9, %c0_38] : memref<12x128xf32, #tpu.memory_space<vmem>>, vector<1x32xf32>
    %95 = vector.broadcast %3 : vector<4x1xf32> to vector<4x32xf32>
    %96 = vector.broadcast %94 : vector<1x32xf32> to vector<4x32xf32>
    %97 = arith.mulf %95, %96 : vector<4x32xf32>
    %98 = arith.addf %93, %97 : vector<4x32xf32>
    %c10 = arith.constant 10 : index
    %c0_39 = arith.constant 0 : index
    %99 = vector.load %arg7[%c10, %c0_39] : memref<12x128xf32, #tpu.memory_space<vmem>>, vector<1x32xf32>
    %100 = vector.broadcast %99 : vector<1x32xf32> to vector<4x32xf32>
    %101 = arith.addf %98, %100 : vector<4x32xf32>
    %cst_40 = arith.constant 0.000000e+00 : f32
    %102 = vector.broadcast %cst_40 : f32 to vector<4x32xf32>
    %103 = arith.maximumf %101, %102 : vector<4x32xf32>
    %c0_41 = arith.constant 0 : index
    %c0_42 = arith.constant 0 : index
    %104 = vector.load %arg6[%c0_41, %c0_42] : memref<32x32xf32, #tpu.memory_space<vmem>>, vector<32x32xf32>
    %cst_43 = arith.constant dense<0.000000e+00> : vector<4x32xf32>
    %105 = tpu.matmul %103, %104, %cst_43 {dimension_numbers = #tpu.dot_dimension_numbers<[1], [0], [0], [1], [0, 0, 1, 1], [], []>} : vector<4x32xf32>, vector<32x32xf32>, vector<4x32xf32> -> vector<4x32xf32>
    %c11 = arith.constant 11 : index
    %c0_44 = arith.constant 0 : index
    %106 = vector.load %arg7[%c11, %c0_44] : memref<12x128xf32, #tpu.memory_space<vmem>>, vector<1x32xf32>
    %107 = vector.broadcast %106 : vector<1x32xf32> to vector<4x32xf32>
    %108 = arith.addf %105, %107 : vector<4x32xf32>
    %cst_45 = arith.constant 0.000000e+00 : f32
    %109 = vector.broadcast %cst_45 : f32 to vector<4x32xf32>
    %110 = arith.maximumf %108, %109 : vector<4x32xf32>
    %cst_46 = arith.constant 0.000000e+00 : f32
    %111 = vector.broadcast %cst_46 : f32 to vector<4x64xf32>
    %112 = tpu.concatenate %78, %86, %54, %60, %111 in 1 : vector<4x16xf32>, vector<4x16xf32>, vector<4x16xf32>, vector<4x16xf32>, vector<4x64xf32> -> vector<4x128xf32>
    %c0_47 = arith.constant 0 : index
    %c0_48 = arith.constant 0 : index
    %113 = vector.load %arg8[%c0_47, %c0_48] : memref<4x128xf32, #tpu.memory_space<vmem>>, vector<4x128xf32>
    tpu.vector_store %arg8[%c0_47, %c0_48], %112 {strides = array<i32>} : memref<4x128xf32, #tpu.memory_space<vmem>>, vector<4x128xf32>,
    %cst_49 = arith.constant 0.000000e+00 : f32
    %114 = vector.broadcast %cst_49 : f32 to vector<4x96xf32>
    %115 = tpu.concatenate %110, %114 in 1 : vector<4x32xf32>, vector<4x96xf32> -> vector<4x128xf32>
    %c0_50 = arith.constant 0 : index
    %c0_51 = arith.constant 0 : index
    %116 = vector.load %arg9[%c0_50, %c0_51] : memref<4x128xf32, #tpu.memory_space<vmem>>, vector<4x128xf32>
    tpu.vector_store %arg9[%c0_50, %c0_51], %115 {strides = array<i32>} : memref<4x128xf32, #tpu.memory_space<vmem>>, vector<4x128xf32>,
    return
  }
}

</mosaic_0001>

<llo_original>
// kernel: tpu_custom_call.1
$region0: #{tpu_custom_call.1}
  #allocation0 [shape = 'u32[]', space=smem, size = 0x4, offset = 0x4, fixed_abs, tag = 'smem constant byte address 0x4 - core index']
  #allocation1 [shape = 'u32[144,128]{1,0:T(1,128)}', space=vmem, size = 0x12000, scoped, tag = 'internal scratch']
  %s0 = inlined_call_operand.vmem [shape: f32[4,10,8], index: 0, kind: input, shape index: {}]
  %s1 = inlined_call_operand.vmem [shape: f32[4,10,10], index: 1, kind: input, shape index: {}]
  %s2 = inlined_call_operand.vmem [shape: f32[4,2], index: 2, kind: input, shape index: {}]
  %s3 = inlined_call_operand.vmem [shape: f32[8,16], index: 3, kind: input, shape index: {}]
  %s4 = inlined_call_operand.vmem [shape: f32[16,32], index: 4, kind: input, shape index: {}]
  %s5 = inlined_call_operand.vmem [shape: f32[16,32], index: 5, kind: input, shape index: {}]
  %s6 = inlined_call_operand.vmem [shape: f32[32,32], index: 6, kind: input, shape index: {}]
  %s7 = inlined_call_operand.vmem [shape: f32[12,128], index: 7, kind: input, shape index: {}]
  %s8 = inlined_call_operand.hbm [shape: f32[4,128], index: 8, kind: output, shape index: {0}]
  %s9 = inlined_call_operand.hbm [shape: f32[4,128], index: 9, kind: output, shape index: {1}]
  %10 = xla_tuple %s8, %s9
  %s11 = sld [smem:[#allocation0]]
  $region50: #{tpu_custom_call.1} parent=0
    _
  %s13 = ssub.s32 1, %s11
  %s14 = scalar_select 0, %s13, %s11
  $region1: #{tpu_custom_call.1} parent=0
    #allocation2 [shape = 'u8[2048]{0}', space=vmem, size = 0x800, scoped, tag = 'output window, operand 0, single buffered']
    #allocation3 [shape = 's32[1]{0}', space=sflag, size = 0x4, scoped, tag = 'scoped memory for tpu_custom_call.1']
    #allocation4 [shape = 'u8[2048]{0}', space=vmem, size = 0x800, scoped, tag = 'output window, operand 1, single buffered']
    #allocation5 [shape = 's32[1]{0}', space=sflag, size = 0x4, scoped, tag = 'scoped memory for tpu_custom_call.1']
    %15 = vsyncpa [#allocation3], 0
    %16 = vsyncpa [#allocation5], 0
    // Predicated region
    $region2: #{tpu_custom_call.1} parent=1 // pred_check
      _
    $region3: #{tpu_custom_call.1} parent=1 // pred_check_branch
      %18 = sbr.rel (0) target = $region5
    $region4: #{tpu_custom_call.1} parent=1 // pred_region
      _
    $region5: #{tpu_custom_call.1} parent=1 // pred_fallthru
      _
    // Predicated region
    $region6: #{tpu_custom_call.1} parent=1 // pred_check
      _
    $region7: #{tpu_custom_call.1} parent=1 // pred_check_branch
      %20 = sbr.rel (0) target = $region9
    $region8: #{tpu_custom_call.1} parent=1 // pred_region
      _
    $region9: #{tpu_custom_call.1} parent=1 // pred_fallthru
      _
    // Predicated region
    $region10: #{tpu_custom_call.1} parent=1 // pred_check
      _
    $region11: #{tpu_custom_call.1} parent=1 // pred_check_branch
      %22 = sbr.rel (0) target = $region13
    $region12: #{tpu_custom_call.1} parent=1 // pred_region
      _
    $region13: #{tpu_custom_call.1} parent=1 // pred_fallthru
      _
    // Predicated region
    $region14: #{tpu_custom_call.1} parent=1 // pred_check
      _
    $region15: #{tpu_custom_call.1} parent=1 // pred_check_branch
      %24 = sbr.rel (0) target = $region17
    $region16: #{tpu_custom_call.1} parent=1 // pred_region
      _
    $region17: #{tpu_custom_call.1} parent=1 // pred_fallthru
      _
    // Predicated region
    $region18: #{tpu_custom_call.1} parent=1 // pred_check
      _
    $region19: #{tpu_custom_call.1} parent=1 // pred_check_branch
      %26 = sbr.rel (0) target = $region21
    $region20: #{tpu_custom_call.1} parent=1 // pred_region
      _
    $region21: #{tpu_custom_call.1} parent=1 // pred_fallthru
      _
    // Predicated region
    $region22: #{tpu_custom_call.1} parent=1 // pred_check
      _
    $region23: #{tpu_custom_call.1} parent=1 // pred_check_branch
      %28 = sbr.rel (0) target = $region25
    $region24: #{tpu_custom_call.1} parent=1 // pred_region
      _
    $region25: #{tpu_custom_call.1} parent=1 // pred_fallthru
      _
    // Predicated region
    $region26: #{tpu_custom_call.1} parent=1 // pred_check
      _
    $region27: #{tpu_custom_call.1} parent=1 // pred_check_branch
      %30 = sbr.rel (0) target = $region29
    $region28: #{tpu_custom_call.1} parent=1 // pred_region
      _
    $region29: #{tpu_custom_call.1} parent=1 // pred_fallthru
      _
    // Predicated region
    $region30: #{tpu_custom_call.1} parent=1 // pred_check
      _
    $region31: #{tpu_custom_call.1} parent=1 // pred_check_branch
      %32 = sbr.rel (0) target = $region33
    $region32: #{tpu_custom_call.1} parent=1 // pred_region
      _
    $region33: #{tpu_custom_call.1} parent=1 // pred_fallthru
      _
    %v33 = vld [vmem:[%s0] sm:$0xff]
    %v34 = vld [vmem:[%s0 + $0x8] sm:$0x3]
    %v35 = vld [vmem:[%s0 + $0x10] sm:$0xff]
    %v36 = vld [vmem:[%s0 + $0x18] sm:$0x3]
    %v37 = vld [vmem:[%s0 + $0x20] sm:$0xff]
    %v38 = vld [vmem:[%s0 + $0x28] sm:$0x3]
    %v39 = vld [vmem:[%s0 + $0x30] sm:$0xff]
    %v40 = vld [vmem:[%s0 + $0x38] sm:$0x3]
    %v41 = vld [vmem:[%s1] sm:$0xff]
    %v42 = vld [vmem:[%s1 + $0x8] sm:$0x3]
    %v43 = vld [vmem:[%s1 + $0x10] sm:$0xff]
    %v44 = vld [vmem:[%s1 + $0x18] sm:$0x3]
    %v45 = vld [vmem:[%s1 + $0x20] sm:$0xff]
    %v46 = vld [vmem:[%s1 + $0x28] sm:$0x3]
    %v47 = vld [vmem:[%s1 + $0x30] sm:$0xff]
    %v48 = vld [vmem:[%s1 + $0x38] sm:$0x3]
    %v49 = vld [vmem:[%s2] sm:$0xf]
    %v50 = vlaneseq
    %v51 = vshrl.u32 %v50, 7
    %v52 = vadd.s32 %v51, 8
    %v53 = vlaneseq
    %v54 = vand.u32 %v53, 127
    %vm55 = vcmp.eq.s32.totalorder %v51, %v54
    %vm56 = vcmp.eq.s32.totalorder %v52, %v54
    %v57 = vsel %vm55, 1, 0
    %v58 = vsel %vm56, 1, 0
    %v59 = vcvt.s32.f32 %v57
    %v60 = vcvt.s32.f32 %v58
    %v61 = vmul.f32 %v41, %v59
    %v62 = vmul.f32 %v42, %v60
    %v63 = vmul.f32 %v43, %v59
    %v64 = vmul.f32 %v44, %v60
    %v65 = vmul.f32 %v45, %v59
    %v66 = vmul.f32 %v46, %v60
    %v67 = vmul.f32 %v47, %v59
    %v68 = vmul.f32 %v48, %v60
    %vm69 = vcmask 80896
    %v70 = vsel %vm69, %v61, 0.0
    %71 = vadd.xlane.f32.xlu0 %v70
    %v72 = vpop.xlane.xlu0 %71
    %vm73 = vcmask 74752
    %v74 = vsel %vm73, %v62, 0.0
    %75 = vadd.xlane.f32.xlu0 %v74
    %v76 = vpop.xlane.xlu0 %75
    %v77 = vsel %vm69, %v63, 0.0
    %78 = vadd.xlane.f32.xlu0 %v77
    %v79 = vpop.xlane.xlu0 %78
    %v80 = vsel %vm73, %v64, 0.0
    %81 = vadd.xlane.f32.xlu0 %v80
    %v82 = vpop.xlane.xlu0 %81
    %v83 = vsel %vm69, %v65, 0.0
    %84 = vadd.xlane.f32.xlu0 %v83
    %v85 = vpop.xlane.xlu0 %84
    %v86 = vsel %vm73, %v66, 0.0
    %87 = vadd.xlane.f32.xlu0 %v86
    %v88 = vpop.xlane.xlu0 %87
    %v89 = vsel %vm69, %v67, 0.0
    %90 = vadd.xlane.f32.xlu0 %v89
    %v91 = vpop.xlane.xlu0 %90
    %v92 = vsel %vm73, %v68, 0.0
    %93 = vadd.xlane.f32.xlu0 %v92
    %v94 = vpop.xlane.xlu0 %93
    %v95 = vsel %vm69, %v41, 0.0
    %96 = vadd.xlane.f32.xlu0 %v95
    %v97 = vpop.xlane.xlu0 %96
    %v98 = vsel %vm73, %v42, 0.0
    %99 = vadd.xlane.f32.xlu0 %v98
    %v100 = vpop.xlane.xlu0 %99
    %v101 = vsel %vm69, %v43, 0.0
    %102 = vadd.xlane.f32.xlu0 %v101
    %v103 = vpop.xlane.xlu0 %102
    %v104 = vsel %vm73, %v44, 0.0
    %105 = vadd.xlane.f32.xlu0 %v104
    %v106 = vpop.xlane.xlu0 %105
    %v107 = vsel %vm69, %v45, 0.0
    %108 = vadd.xlane.f32.xlu0 %v107
    %v109 = vpop.xlane.xlu0 %108
    %v110 = vsel %vm73, %v46, 0.0
    %111 = vadd.xlane.f32.xlu0 %v110
    %v112 = vpop.xlane.xlu0 %111
    %v113 = vsel %vm69, %v47, 0.0
    %114 = vadd.xlane.f32.xlu0 %v113
    %v115 = vpop.xlane.xlu0 %114
    %v116 = vsel %vm73, %v48, 0.0
    %117 = vadd.xlane.f32.xlu0 %v116
    %v118 = vpop.xlane.xlu0 %117
    %v119 = vsub.f32 %v97, %v72
    %v120 = vsub.f32 %v100, %v76
    %v121 = vsub.f32 %v103, %v79
    %v122 = vsub.f32 %v106, %v82
    %v123 = vsub.f32 %v109, %v85
    %v124 = vsub.f32 %v112, %v88
    %v125 = vsub.f32 %v115, %v91
    %v126 = vsub.f32 %v118, %v94
    %v127 = vadd.f32 %v119, 1.0
    %v128 = vadd.f32 %v120, 1.0
    %v129 = vadd.f32 %v121, 1.0
    %v130 = vadd.f32 %v122, 1.0
    %v131 = vadd.f32 %v123, 1.0
    %v132 = vadd.f32 %v124, 1.0
    %v133 = vadd.f32 %v125, 1.0
    %v134 = vadd.f32 %v126, 1.0
    %v135 = vmax.f32 %v127, 1.0
    %v136 = vmax.f32 %v128, 1.0
    %v137 = vmax.f32 %v129, 1.0
    %v138 = vmax.f32 %v130, 1.0
    %v139 = vmax.f32 %v131, 1.0
    %v140 = vmax.f32 %v132, 1.0
    %v141 = vmax.f32 %v133, 1.0
    %v142 = vmax.f32 %v134, 1.0
    %v143 = vrsqrt.pop %v135
    %v144 = vrsqrt.pop %v136
    %v145 = vrsqrt.pop %v137
    %v146 = vrsqrt.pop %v138
    %v147 = vrsqrt.pop %v139
    %v148 = vrsqrt.pop %v140
    %v149 = vrsqrt.pop %v141
    %v150 = vrsqrt.pop %v142
    %v159 = vcombine.high %v33, %v33
    %v161 = vunpack.c.l.s4 1983009808
    %v162 = vunpack.c.0.s8 %v161
    %v163 = vlaneseq
    %v164 = vshrl.u32 %v163, 7
    %v165 = vsub.s32 %v162, %v164
    %v166 = vrot.slane %v33, %v165
    %v168 = vunpack.c.l.s4 1983009808
    %v169 = vunpack.c.0.s8 %v168
    %v170 = vlaneseq
    %v171 = vshrl.u32 %v170, 7
    %v172 = vsub.s32 %v169, %v171
    %v173 = vrot.slane %v159, %v172
    %v174 = vcombine.high %v166, %v166
    %v175 = vcombine.high %v173, %v173
    %v177 = vunpack.c.l.s4 1983009808
    %v178 = vunpack.c.0.s8 %v177
    %v179 = vlaneseq
    %v180 = vshrl.u32 %v179, 7
    %v181 = vsub.s32 %v178, %v180
    %v182 = vrot.slane %v34, %v181
    %v183 = vcombine.high %v35, %v35
    %v185 = vunpack.c.l.s4 1983009808
    %v186 = vunpack.c.0.s8 %v185
    %v187 = vlaneseq
    %v188 = vshrl.u32 %v187, 7
    %v189 = vsub.s32 %v186, %v188
    %v190 = vrot.slane %v35, %v189
    %v192 = vunpack.c.l.s4 1983009808
    %v193 = vunpack.c.0.s8 %v192
    %v194 = vlaneseq
    %v195 = vshrl.u32 %v194, 7
    %v196 = vsub.s32 %v193, %v195
    %v197 = vrot.slane %v183, %v196
    %v198 = vcombine.high %v190, %v190
    %v199 = vcombine.high %v197, %v197
    %v201 = vunpack.c.l.s4 1983009808
    %v202 = vunpack.c.0.s8 %v201
    %v203 = vlaneseq
    %v204 = vshrl.u32 %v203, 7
    %v205 = vsub.s32 %v202, %v204
    %v206 = vrot.slane %v36, %v205
    %v207 = vcombine.high %v37, %v37
    %v209 = vunpack.c.l.s4 1983009808
    %v210 = vunpack.c.0.s8 %v209
    %v211 = vlaneseq
    %v212 = vshrl.u32 %v211, 7
    %v213 = vsub.s32 %v210, %v212
    %v214 = vrot.slane %v37, %v213
    %v216 = vunpack.c.l.s4 1983009808
    %v217 = vunpack.c.0.s8 %v216
    %v218 = vlaneseq
    %v219 = vshrl.u32 %v218, 7
    %v220 = vsub.s32 %v217, %v219
    %v221 = vrot.slane %v207, %v220
    %v222 = vcombine.high %v214, %v214
    %v223 = vcombine.high %v221, %v221
    %v225 = vunpack.c.l.s4 1983009808
    %v226 = vunpack.c.0.s8 %v225
    %v227 = vlaneseq
    %v228 = vshrl.u32 %v227, 7
    %v229 = vsub.s32 %v226, %v228
    %v230 = vrot.slane %v38, %v229
    %v231 = vcombine.high %v39, %v39
    %v233 = vunpack.c.l.s4 1983009808
    %v234 = vunpack.c.0.s8 %v233
    %v235 = vlaneseq
    %v236 = vshrl.u32 %v235, 7
    %v237 = vsub.s32 %v234, %v236
    %v238 = vrot.slane %v39, %v237
    %v240 = vunpack.c.l.s4 1983009808
    %v241 = vunpack.c.0.s8 %v240
    %v242 = vlaneseq
    %v243 = vshrl.u32 %v242, 7
    %v244 = vsub.s32 %v241, %v243
    %v245 = vrot.slane %v231, %v244
    %v246 = vcombine.high %v238, %v238
    %v247 = vcombine.high %v245, %v245
    %v249 = vunpack.c.l.s4 1983009808
    %v250 = vunpack.c.0.s8 %v249
    %v251 = vlaneseq
    %v252 = vshrl.u32 %v251, 7
    %v253 = vsub.s32 %v250, %v252
    %v254 = vrot.slane %v40, %v253
    %v255 = vld [vmem:[%s3] sm:$0xff]
    %v256 = vcombine.low %v166, %v174
    %v257 = vcombine.low %v173, %v175
    %v259 = vunpack.c.l.s4 1983009808
    %v260 = vunpack.c.0.s8 %v259
    %v261 = vlaneseq
    %v262 = vshrl.u32 %v261, 7
    %v263 = vsub.s32 %v260, %v262
    %v264 = vrot.slane %v256, %v263
    %v266 = vunpack.c.l.s4 1983009808
    %v267 = vunpack.c.0.s8 %v266
    %v268 = vlaneseq
    %v269 = vshrl.u32 %v268, 7
    %v270 = vsub.s32 %v267, %v269
    %v271 = vrot.slane %v257, %v270
    %v272 = vcombine.low %v264, %v271
    %v273 = vcombine.low %v182, %v190
    %v274 = vcombine.low %v198, %v197
    %v276 = vunpack.c.l.s4 1983009808
    %v277 = vunpack.c.0.s8 %v276
    %v278 = vlaneseq
    %v279 = vshrl.u32 %v278, 7
    %v280 = vsub.s32 %v277, %v279
    %v281 = vrot.slane %v273, %v280
    %v283 = vunpack.c.l.s4 1983009808
    %v284 = vunpack.c.0.s8 %v283
    %v285 = vlaneseq
    %v286 = vshrl.u32 %v285, 7
    %v287 = vsub.s32 %v284, %v286
    %v288 = vrot.slane %v274, %v287
    %v289 = vcombine.low %v281, %v288
    %v290 = vcombine.low %v199, %v206
    %v291 = vcombine.low %v214, %v222
    %v293 = vunpack.c.l.s4 1983009808
    %v294 = vunpack.c.0.s8 %v293
    %v295 = vlaneseq
    %v296 = vshrl.u32 %v295, 7
    %v297 = vsub.s32 %v294, %v296
    %v298 = vrot.slane %v290, %v297
    %v300 = vunpack.c.l.s4 1983009808
    %v301 = vunpack.c.0.s8 %v300
    %v302 = vlaneseq
    %v303 = vshrl.u32 %v302, 7
    %v304 = vsub.s32 %v301, %v303
    %v305 = vrot.slane %v291, %v304
    %v306 = vcombine.low %v298, %v305
    %v307 = vcombine.low %v221, %v223
    %v308 = vcombine.low %v230, %v238
    %v310 = vunpack.c.l.s4 1983009808
    %v311 = vunpack.c.0.s8 %v310
    %v312 = vlaneseq
    %v313 = vshrl.u32 %v312, 7
    %v314 = vsub.s32 %v311, %v313
    %v315 = vrot.slane %v307, %v314
    %v317 = vunpack.c.l.s4 1983009808
    %v318 = vunpack.c.0.s8 %v317
    %v319 = vlaneseq
    %v320 = vshrl.u32 %v319, 7
    %v321 = vsub.s32 %v318, %v320
    %v322 = vrot.slane %v308, %v321
    %v323 = vcombine.low %v315, %v322
    %v324 = vcombine.low %v246, %v245
    %v325 = vcombine.low %v247, %v254
    %v327 = vunpack.c.l.s4 1983009808
    %v328 = vunpack.c.0.s8 %v327
    %v329 = vlaneseq
    %v330 = vshrl.u32 %v329, 7
    %v331 = vsub.s32 %v328, %v330
    %v332 = vrot.slane %v324, %v331
    %v334 = vunpack.c.l.s4 1983009808
    %v335 = vunpack.c.0.s8 %v334
    %v336 = vlaneseq
    %v337 = vshrl.u32 %v336, 7
    %v338 = vsub.s32 %v335, %v337
    %v339 = vrot.slane %v325, %v338
    %v340 = vcombine.low %v332, %v339
    %vm341 = vcmask 64512
    %v342 = vsel %vm341, %v272, 0
    %v344 = vsel %vm341, %v289, 0
    %v346 = vsel %vm341, %v306, 0
    %v348 = vsel %vm341, %v323, 0
    %v350 = vsel %vm341, %v340, 0
    %352 = vmatprep.subr.mxu0 0.0
    %353 = vmatpush1.msra.mxu0 %v255
    %354 = vmatprep.subr.mxu0 0.0
    %355 = vmatpush1.msra.mxu0 0.0
    %356 = vmatprep.subr.mxu0 0.0
    %357 = vmatpush1.msra.mxu0 0.0
    %358 = vmatprep.subr.mxu0 0.0
    %359 = vmatpush1.msra.mxu0 0.0
    %360 = vmatprep.subr.mxu0 0.0
    %361 = vmatpush1.msra.mxu0 0.0
    %362 = vmatprep.subr.mxu0 0.0
    %363 = vmatpush1.msra.mxu0 0.0
    %364 = vmatprep.subr.mxu0 0.0
    %365 = vmatpush1.msra.mxu0 0.0
    %366 = vmatprep.subr.mxu0 0.0
    %367 = vmatpush1.msra.mxu0 0.0
    %368 = vmatprep.subr.mxu0 0.0
    %369 = vmatpush1.msra.mxu0 0.0
    %370 = vmatprep.subr.mxu0 0.0
    %371 = vmatpush1.msra.mxu0 0.0
    %372 = vmatprep.subr.mxu0 0.0
    %373 = vmatpush1.msra.mxu0 0.0
    %374 = vmatprep.subr.mxu0 0.0
    %375 = vmatpush1.msra.mxu0 0.0
    %376 = vmatprep.subr.mxu0 0.0
    %377 = vmatpush1.msra.mxu0 0.0
    %378 = vmatprep.subr.mxu0 0.0
    %379 = vmatpush1.msra.mxu0 0.0
    %380 = vmatprep.subr.mxu0 0.0
    %381 = vmatpush1.msra.mxu0 0.0
    %382 = vmatprep.subr.mxu0 0.0
    %383 = vmatpush1.msra.mxu0 0.0
    %384 = vmatprep.subr.mxu0 0.0
    %385 = vmatpush1.msra.mxu0 0.0
    %386 = vmatprep.subr.mxu0 0.0
    %387 = vmatpush1.msra.mxu0 0.0
    %388 = vmatprep.subr.mxu0 0.0
    %389 = vmatpush1.msra.mxu0 0.0
    %390 = vmatprep.subr.mxu0 0.0
    %391 = vmatpush1.msra.mxu0 0.0
    %392 = vmatprep.subr.mxu0 0.0
    %393 = vmatpush1.msra.mxu0 0.0
    %394 = vmatprep.subr.mxu0 0.0
    %395 = vmatpush1.msra.mxu0 0.0
    %396 = vmatprep.subr.mxu0 0.0
    %397 = vmatpush1.msra.mxu0 0.0
    %398 = vmatprep.subr.mxu0 0.0
    %399 = vmatpush1.msra.mxu0 0.0
    %400 = vmatprep.subr.mxu0 0.0
    %401 = vmatpush1.msra.mxu0 0.0
    %402 = vmatprep.subr.mxu0 0.0
    %403 = vmatpush1.msra.mxu0 0.0
    %404 = vmatprep.subr.mxu0 0.0
    %405 = vmatpush1.msra.mxu0 0.0
    %406 = vmatprep.subr.mxu0 0.0
    %407 = vmatpush1.msra.mxu0 0.0
    %408 = vmatprep.subr.mxu0 0.0
    %409 = vmatpush1.msra.mxu0 0.0
    %410 = vmatprep.subr.mxu0 0.0
    %411 = vmatpush1.msra.mxu0 0.0
    %412 = vmatprep.subr.mxu0 0.0
    %413 = vmatpush1.msra.mxu0 0.0
    %414 = vmatprep.subr.mxu0 0.0
    %415 = vmatpush1.msra.mxu0 0.0
    %416 = vmatprep.mubr.f32.mxu0 0.0
    %417 = vmatmul.mubr.f32.gmra.mrb[0].mxu0 %v342
    %v418 = vpop.f32.mrb[0].mxu0
    %v419 = vadd.f32 0.0, %v418
    %v420 = vpop.f32.mrb[0].mxu0
    %421 = vmatprep.mubr.f32.mxu0 0.0
    %422 = vmatmul.mubr.f32.gmra.mrb[0].mxu0 %v344
    %v423 = vpop.f32.mrb[0].mxu0
    %v424 = vadd.f32 0.0, %v423
    %v425 = vpop.f32.mrb[0].mxu0
    %426 = vmatprep.mubr.f32.mxu0 0.0
    %427 = vmatmul.mubr.f32.gmra.mrb[0].mxu0 %v346
    %v428 = vpop.f32.mrb[0].mxu0
    %v429 = vadd.f32 0.0, %v428
    %v430 = vpop.f32.mrb[0].mxu0
    %431 = vmatprep.mubr.f32.mxu0 0.0
    %432 = vmatmul.mubr.f32.gmra.mrb[0].mxu0 %v348
    %v433 = vpop.f32.mrb[0].mxu0
    %v434 = vadd.f32 0.0, %v433
    %v435 = vpop.f32.mrb[0].mxu0
    %436 = vmatprep.mubr.f32.mxu0 0.0
    %437 = vmatmul.mubr.f32.gmra.mrb[0].mxu0 %v350
    %v438 = vpop.f32.mrb[0].mxu0
    %v439 = vadd.f32 0.0, %v438
    %v440 = vpop.f32.mrb[0].mxu0
    %441 = vdwg.mxu0
    %v447 = vcombine.high %v419, %v419
    %v449 = vunpack.c.l.s4 1983009808
    %v450 = vunpack.c.0.s8 %v449
    %v451 = vlaneseq
    %v452 = vshrl.u32 %v451, 7
    %v453 = vsub.s32 %v450, %v452
    %v454 = vrot.slane %v419, %v453
    %v456 = vunpack.c.l.s4 1983009808
    %v457 = vunpack.c.0.s8 %v456
    %v458 = vlaneseq
    %v459 = vshrl.u32 %v458, 7
    %v460 = vsub.s32 %v457, %v459
    %v461 = vrot.slane %v447, %v460
    %v462 = vcombine.high %v454, %v454
    %v463 = vcombine.high %v461, %v461
    %v464 = vcombine.high %v424, %v424
    %v466 = vunpack.c.l.s4 1983009808
    %v467 = vunpack.c.0.s8 %v466
    %v468 = vlaneseq
    %v469 = vshrl.u32 %v468, 7
    %v470 = vsub.s32 %v467, %v469
    %v471 = vrot.slane %v424, %v470
    %v473 = vunpack.c.l.s4 1983009808
    %v474 = vunpack.c.0.s8 %v473
    %v475 = vlaneseq
    %v476 = vshrl.u32 %v475, 7
    %v477 = vsub.s32 %v474, %v476
    %v478 = vrot.slane %v464, %v477
    %v479 = vcombine.high %v471, %v471
    %v480 = vcombine.high %v478, %v478
    %v481 = vcombine.high %v429, %v429
    %v483 = vunpack.c.l.s4 1983009808
    %v484 = vunpack.c.0.s8 %v483
    %v485 = vlaneseq
    %v486 = vshrl.u32 %v485, 7
    %v487 = vsub.s32 %v484, %v486
    %v488 = vrot.slane %v429, %v487
    %v490 = vunpack.c.l.s4 1983009808
    %v491 = vunpack.c.0.s8 %v490
    %v492 = vlaneseq
    %v493 = vshrl.u32 %v492, 7
    %v494 = vsub.s32 %v491, %v493
    %v495 = vrot.slane %v481, %v494
    %v496 = vcombine.high %v488, %v488
    %v497 = vcombine.high %v495, %v495
    %v498 = vcombine.high %v434, %v434
    %v500 = vunpack.c.l.s4 1983009808
    %v501 = vunpack.c.0.s8 %v500
    %v502 = vlaneseq
    %v503 = vshrl.u32 %v502, 7
    %v504 = vsub.s32 %v501, %v503
    %v505 = vrot.slane %v434, %v504
    %v507 = vunpack.c.l.s4 1983009808
    %v508 = vunpack.c.0.s8 %v507
    %v509 = vlaneseq
    %v510 = vshrl.u32 %v509, 7
    %v511 = vsub.s32 %v508, %v510
    %v512 = vrot.slane %v498, %v511
    %v513 = vcombine.high %v505, %v505
    %v514 = vcombine.high %v512, %v512
    %v515 = vcombine.high %v439, %v439
    %v517 = vunpack.c.l.s4 1983009808
    %v518 = vunpack.c.0.s8 %v517
    %v519 = vlaneseq
    %v520 = vshrl.u32 %v519, 7
    %v521 = vsub.s32 %v518, %v520
    %v522 = vrot.slane %v439, %v521
    %v524 = vunpack.c.l.s4 1983009808
    %v525 = vunpack.c.0.s8 %v524
    %v526 = vlaneseq
    %v527 = vshrl.u32 %v526, 7
    %v528 = vsub.s32 %v525, %v527
    %v529 = vrot.slane %v515, %v528
    %v530 = vcombine.high %v522, %v522
    %v531 = vcombine.high %v529, %v529
    %v561 = vunpack.c.l.s4 269488144
    %v562 = vunpack.c.0.s8 %v561
    %v563 = vlaneseq
    %v564 = vshrl.u32 %v563, 7
    %v565 = vsub.s32 %v562, %v564
    %v566 = vrot.slane %v143, %v565
    %v568 = vunpack.c.l.s4 842150450
    %v569 = vunpack.c.0.s8 %v568
    %v570 = vlaneseq
    %v571 = vshrl.u32 %v570, 7
    %v572 = vsub.s32 %v569, %v571
    %v573 = vrot.slane %v143, %v572
    %v575 = vunpack.c.l.s4 1414812756
    %v576 = vunpack.c.0.s8 %v575
    %v577 = vlaneseq
    %v578 = vshrl.u32 %v577, 7
    %v579 = vsub.s32 %v576, %v578
    %v580 = vrot.slane %v143, %v579
    %v582 = vunpack.c.l.s4 1987475062
    %v583 = vunpack.c.0.s8 %v582
    %v584 = vlaneseq
    %v585 = vshrl.u32 %v584, 7
    %v586 = vsub.s32 %v583, %v585
    %v587 = vrot.slane %v143, %v586
    %v589 = vunpack.c.l.s4 269488144
    %v590 = vunpack.c.0.s8 %v589
    %v591 = vlaneseq
    %v592 = vshrl.u32 %v591, 7
    %v593 = vsub.s32 %v590, %v592
    %v594 = vrot.slane %v144, %v593
    %v596 = vunpack.c.l.s4 269488144
    %v597 = vunpack.c.0.s8 %v596
    %v598 = vlaneseq
    %v599 = vshrl.u32 %v598, 7
    %v600 = vsub.s32 %v597, %v599
    %v601 = vrot.slane %v145, %v600
    %v603 = vunpack.c.l.s4 842150450
    %v604 = vunpack.c.0.s8 %v603
    %v605 = vlaneseq
    %v606 = vshrl.u32 %v605, 7
    %v607 = vsub.s32 %v604, %v606
    %v608 = vrot.slane %v145, %v607
    %v610 = vunpack.c.l.s4 1414812756
    %v611 = vunpack.c.0.s8 %v610
    %v612 = vlaneseq
    %v613 = vshrl.u32 %v612, 7
    %v614 = vsub.s32 %v611, %v613
    %v615 = vrot.slane %v145, %v614
    %v617 = vunpack.c.l.s4 1987475062
    %v618 = vunpack.c.0.s8 %v617
    %v619 = vlaneseq
    %v620 = vshrl.u32 %v619, 7
    %v621 = vsub.s32 %v618, %v620
    %v622 = vrot.slane %v145, %v621
    %v624 = vunpack.c.l.s4 269488144
    %v625 = vunpack.c.0.s8 %v624
    %v626 = vlaneseq
    %v627 = vshrl.u32 %v626, 7
    %v628 = vsub.s32 %v625, %v627
    %v629 = vrot.slane %v146, %v628
    %v631 = vunpack.c.l.s4 269488144
    %v632 = vunpack.c.0.s8 %v631
    %v633 = vlaneseq
    %v634 = vshrl.u32 %v633, 7
    %v635 = vsub.s32 %v632, %v634
    %v636 = vrot.slane %v147, %v635
    %v638 = vunpack.c.l.s4 842150450
    %v639 = vunpack.c.0.s8 %v638
    %v640 = vlaneseq
    %v641 = vshrl.u32 %v640, 7
    %v642 = vsub.s32 %v639, %v641
    %v643 = vrot.slane %v147, %v642
    %v645 = vunpack.c.l.s4 1414812756
    %v646 = vunpack.c.0.s8 %v645
    %v647 = vlaneseq
    %v648 = vshrl.u32 %v647, 7
    %v649 = vsub.s32 %v646, %v648
    %v650 = vrot.slane %v147, %v649
    %v652 = vunpack.c.l.s4 1987475062
    %v653 = vunpack.c.0.s8 %v652
    %v654 = vlaneseq
    %v655 = vshrl.u32 %v654, 7
    %v656 = vsub.s32 %v653, %v655
    %v657 = vrot.slane %v147, %v656
    %v659 = vunpack.c.l.s4 269488144
    %v660 = vunpack.c.0.s8 %v659
    %v661 = vlaneseq
    %v662 = vshrl.u32 %v661, 7
    %v663 = vsub.s32 %v660, %v662
    %v664 = vrot.slane %v148, %v663
    %v666 = vunpack.c.l.s4 269488144
    %v667 = vunpack.c.0.s8 %v666
    %v668 = vlaneseq
    %v669 = vshrl.u32 %v668, 7
    %v670 = vsub.s32 %v667, %v669
    %v671 = vrot.slane %v149, %v670
    %v673 = vunpack.c.l.s4 842150450
    %v674 = vunpack.c.0.s8 %v673
    %v675 = vlaneseq
    %v676 = vshrl.u32 %v675, 7
    %v677 = vsub.s32 %v674, %v676
    %v678 = vrot.slane %v149, %v677
    %v680 = vunpack.c.l.s4 1414812756
    %v681 = vunpack.c.0.s8 %v680
    %v682 = vlaneseq
    %v683 = vshrl.u32 %v682, 7
    %v684 = vsub.s32 %v681, %v683
    %v685 = vrot.slane %v149, %v684
    %v687 = vunpack.c.l.s4 1987475062
    %v688 = vunpack.c.0.s8 %v687
    %v689 = vlaneseq
    %v690 = vshrl.u32 %v689, 7
    %v691 = vsub.s32 %v688, %v690
    %v692 = vrot.slane %v149, %v691
    %v694 = vunpack.c.l.s4 269488144
    %v695 = vunpack.c.0.s8 %v694
    %v696 = vlaneseq
    %v697 = vshrl.u32 %v696, 7
    %v698 = vsub.s32 %v695, %v697
    %v699 = vrot.slane %v150, %v698
    %v720 = vmul.f32 %v454, %v566
    %v721 = vmul.f32 %v462, %v573
    %v722 = vmul.f32 %v461, %v580
    %v723 = vmul.f32 %v463, %v587
    %v724 = vmul.f32 %v471, %v594
    %v725 = vmul.f32 %v479, %v601
    %v726 = vmul.f32 %v478, %v608
    %v727 = vmul.f32 %v480, %v615
    %v728 = vmul.f32 %v488, %v622
    %v729 = vmul.f32 %v496, %v629
    %v730 = vmul.f32 %v495, %v636
    %v731 = vmul.f32 %v497, %v643
    %v732 = vmul.f32 %v505, %v650
    %v733 = vmul.f32 %v513, %v657
    %v734 = vmul.f32 %v512, %v664
    %v735 = vmul.f32 %v514, %v671
    %v736 = vmul.f32 %v522, %v678
    %v737 = vmul.f32 %v530, %v685
    %v738 = vmul.f32 %v529, %v692
    %v739 = vmul.f32 %v531, %v699
    %v740 = vsub.f32 1.0, %v72
    %v741 = vsub.f32 1.0, %v76
    %v742 = vsub.f32 1.0, %v79
    %v743 = vsub.f32 1.0, %v82
    %v744 = vsub.f32 1.0, %v85
    %v745 = vsub.f32 1.0, %v88
    %v746 = vsub.f32 1.0, %v91
    %v747 = vsub.f32 1.0, %v94
    %v768 = vcombine.low %v720, %v721
    %v769 = vcombine.low %v722, %v723
    %v771 = vunpack.c.l.s4 1983009808
    %v772 = vunpack.c.0.s8 %v771
    %v773 = vlaneseq
    %v774 = vshrl.u32 %v773, 7
    %v775 = vsub.s32 %v772, %v774
    %v776 = vrot.slane %v768, %v775
    %v778 = vunpack.c.l.s4 1983009808
    %v779 = vunpack.c.0.s8 %v778
    %v780 = vlaneseq
    %v781 = vshrl.u32 %v780, 7
    %v782 = vsub.s32 %v779, %v781
    %v783 = vrot.slane %v769, %v782
    %v784 = vcombine.low %v776, %v783
    %v786 = vunpack.c.l.s4 1983009808
    %v787 = vunpack.c.0.s8 %v786
    %v788 = vlaneseq
    %v789 = vshrl.u32 %v788, 7
    %v790 = vsub.s32 %v787, %v789
    %v791 = vrot.slane %v724, %v790
    %v792 = vcombine.low %v725, %v726
    %v793 = vcombine.low %v727, %v728
    %v795 = vunpack.c.l.s4 1983009808
    %v796 = vunpack.c.0.s8 %v795
    %v797 = vlaneseq
    %v798 = vshrl.u32 %v797, 7
    %v799 = vsub.s32 %v796, %v798
    %v800 = vrot.slane %v792, %v799
    %v802 = vunpack.c.l.s4 1983009808
    %v803 = vunpack.c.0.s8 %v802
    %v804 = vlaneseq
    %v805 = vshrl.u32 %v804, 7
    %v806 = vsub.s32 %v803, %v805
    %v807 = vrot.slane %v793, %v806
    %v808 = vcombine.low %v800, %v807
    %v810 = vunpack.c.l.s4 1983009808
    %v811 = vunpack.c.0.s8 %v810
    %v812 = vlaneseq
    %v813 = vshrl.u32 %v812, 7
    %v814 = vsub.s32 %v811, %v813
    %v815 = vrot.slane %v729, %v814
    %v816 = vcombine.low %v730, %v731
    %v817 = vcombine.low %v732, %v733
    %v819 = vunpack.c.l.s4 1983009808
    %v820 = vunpack.c.0.s8 %v819
    %v821 = vlaneseq
    %v822 = vshrl.u32 %v821, 7
    %v823 = vsub.s32 %v820, %v822
    %v824 = vrot.slane %v816, %v823
    %v826 = vunpack.c.l.s4 1983009808
    %v827 = vunpack.c.0.s8 %v826
    %v828 = vlaneseq
    %v829 = vshrl.u32 %v828, 7
    %v830 = vsub.s32 %v827, %v829
    %v831 = vrot.slane %v817, %v830
    %v832 = vcombine.low %v824, %v831
    %v834 = vunpack.c.l.s4 1983009808
    %v835 = vunpack.c.0.s8 %v834
    %v836 = vlaneseq
    %v837 = vshrl.u32 %v836, 7
    %v838 = vsub.s32 %v835, %v837
    %v839 = vrot.slane %v734, %v838
    %v840 = vcombine.low %v735, %v736
    %v841 = vcombine.low %v737, %v738
    %v843 = vunpack.c.l.s4 1983009808
    %v844 = vunpack.c.0.s8 %v843
    %v845 = vlaneseq
    %v846 = vshrl.u32 %v845, 7
    %v847 = vsub.s32 %v844, %v846
    %v848 = vrot.slane %v840, %v847
    %v850 = vunpack.c.l.s4 1983009808
    %v851 = vunpack.c.0.s8 %v850
    %v852 = vlaneseq
    %v853 = vshrl.u32 %v852, 7
    %v854 = vsub.s32 %v851, %v853
    %v855 = vrot.slane %v841, %v854
    %v856 = vcombine.low %v848, %v855
    %v858 = vunpack.c.l.s4 1983009808
    %v859 = vunpack.c.0.s8 %v858
    %v860 = vlaneseq
    %v861 = vshrl.u32 %v860, 7
    %v862 = vsub.s32 %v859, %v861
    %v863 = vrot.slane %v739, %v862
    %v872 = vmul.f32 %v740, %v784
    %v873 = vmul.f32 %v741, %v791
    %v874 = vmul.f32 %v742, %v808
    %v875 = vmul.f32 %v743, %v815
    %v876 = vmul.f32 %v744, %v832
    %v877 = vmul.f32 %v745, %v839
    %v878 = vmul.f32 %v746, %v856
    %v879 = vmul.f32 %v747, %v863
    %v881 = vsel %vm69, %v41, 0
    %v884 = vsel %vm69, %v42, 0
    %vm886 = vcmask 1041408
    %v887 = vsel %vm886, %v791, 0
    %889 = vmatprep.subr.mxu0 0.0
    %890 = vmatpush1.msra.mxu0 %v784
    %891 = vmatprep.subr.mxu0 0.0
    %892 = vmatpush1.msra.mxu0 %v887
    %893 = vmatprep.subr.mxu0 0.0
    %894 = vmatpush1.msra.mxu0 0.0
    %895 = vmatprep.subr.mxu0 0.0
    %896 = vmatpush1.msra.mxu0 0.0
    %897 = vmatprep.subr.mxu0 0.0
    %898 = vmatpush1.msra.mxu0 0.0
    %899 = vmatprep.subr.mxu0 0.0
    %900 = vmatpush1.msra.mxu0 0.0
    %901 = vmatprep.subr.mxu0 0.0
    %902 = vmatpush1.msra.mxu0 0.0
    %903 = vmatprep.subr.mxu0 0.0
    %904 = vmatpush1.msra.mxu0 0.0
    %905 = vmatprep.subr.mxu0 0.0
    %906 = vmatpush1.msra.mxu0 0.0
    %907 = vmatprep.subr.mxu0 0.0
    %908 = vmatpush1.msra.mxu0 0.0
    %909 = vmatprep.subr.mxu0 0.0
    %910 = vmatpush1.msra.mxu0 0.0
    %911 = vmatprep.subr.mxu0 0.0
    %912 = vmatpush1.msra.mxu0 0.0
    %913 = vmatprep.subr.mxu0 0.0
    %914 = vmatpush1.msra.mxu0 0.0
    %915 = vmatprep.subr.mxu0 0.0
    %916 = vmatpush1.msra.mxu0 0.0
    %917 = vmatprep.subr.mxu0 0.0
    %918 = vmatpush1.msra.mxu0 0.0
    %919 = vmatprep.subr.mxu0 0.0
    %920 = vmatpush1.msra.mxu0 0.0
    %921 = vmatprep.subr.mxu0 0.0
    %922 = vmatpush1.msra.mxu0 0.0
    %923 = vmatprep.subr.mxu0 0.0
    %924 = vmatpush1.msra.mxu0 0.0
    %925 = vmatprep.subr.mxu0 0.0
    %926 = vmatpush1.msra.mxu0 0.0
    %927 = vmatprep.subr.mxu0 0.0
    %928 = vmatpush1.msra.mxu0 0.0
    %929 = vmatprep.subr.mxu0 0.0
    %930 = vmatpush1.msra.mxu0 0.0
    %931 = vmatprep.subr.mxu0 0.0
    %932 = vmatpush1.msra.mxu0 0.0
    %933 = vmatprep.subr.mxu0 0.0
    %934 = vmatpush1.msra.mxu0 0.0
    %935 = vmatprep.subr.mxu0 0.0
    %936 = vmatpush1.msra.mxu0 0.0
    %937 = vmatprep.subr.mxu0 0.0
    %938 = vmatpush1.msra.mxu0 0.0
    %939 = vmatprep.subr.mxu0 0.0
    %940 = vmatpush1.msra.mxu0 0.0
    %941 = vmatprep.subr.mxu0 0.0
    %942 = vmatpush1.msra.mxu0 0.0
    %943 = vmatprep.subr.mxu0 0.0
    %944 = vmatpush1.msra.mxu0 0.0
    %945 = vmatprep.subr.mxu0 0.0
    %946 = vmatpush1.msra.mxu0 0.0
    %947 = vmatprep.subr.mxu0 0.0
    %948 = vmatpush1.msra.mxu0 0.0
    %949 = vmatprep.subr.mxu0 0.0
    %950 = vmatpush1.msra.mxu0 0.0
    %951 = vmatprep.subr.mxu0 0.0
    %952 = vmatpush1.msra.mxu0 0.0
    %953 = vmatprep.mubr.f32.mxu0 0.0
    %954 = vmatmul.mubr.f32.gmra.mrb[0].mxu0 %v881
    %v955 = vpop.f32.mrb[0].mxu0
    %v956 = vadd.f32 %v872, %v955
    %v957 = vpop.f32.mrb[0].mxu0
    %958 = vmatprep.mubr.f32.mxu0 0.0
    %959 = vmatmul.mubr.f32.gmra.mrb[0].mxu0 %v884
    %v960 = vpop.f32.mrb[0].mxu0
    %v961 = vadd.f32 %v873, %v960
    %v962 = vpop.f32.mrb[0].mxu0
    %963 = vdwg.mxu0
    %v965 = vsel %vm69, %v43, 0
    %v968 = vsel %vm69, %v44, 0
    %v970 = vsel %vm886, %v815, 0
    %972 = vmatprep.subr.mxu0 0.0
    %973 = vmatpush1.msra.mxu0 %v808
    %974 = vmatprep.subr.mxu0 0.0
    %975 = vmatpush1.msra.mxu0 %v970
    %976 = vmatprep.subr.mxu0 0.0
    %977 = vmatpush1.msra.mxu0 0.0
    %978 = vmatprep.subr.mxu0 0.0
    %979 = vmatpush1.msra.mxu0 0.0
    %980 = vmatprep.subr.mxu0 0.0
    %981 = vmatpush1.msra.mxu0 0.0
    %982 = vmatprep.subr.mxu0 0.0
    %983 = vmatpush1.msra.mxu0 0.0
    %984 = vmatprep.subr.mxu0 0.0
    %985 = vmatpush1.msra.mxu0 0.0
    %986 = vmatprep.subr.mxu0 0.0
    %987 = vmatpush1.msra.mxu0 0.0
    %988 = vmatprep.subr.mxu0 0.0
    %989 = vmatpush1.msra.mxu0 0.0
    %990 = vmatprep.subr.mxu0 0.0
    %991 = vmatpush1.msra.mxu0 0.0
    %992 = vmatprep.subr.mxu0 0.0
    %993 = vmatpush1.msra.mxu0 0.0
    %994 = vmatprep.subr.mxu0 0.0
    %995 = vmatpush1.msra.mxu0 0.0
    %996 = vmatprep.subr.mxu0 0.0
    %997 = vmatpush1.msra.mxu0 0.0
    %998 = vmatprep.subr.mxu0 0.0
    %999 = vmatpush1.msra.mxu0 0.0
    %1000 = vmatprep.subr.mxu0 0.0
    %1001 = vmatpush1.msra.mxu0 0.0
    %1002 = vmatprep.subr.mxu0 0.0
    %1003 = vmatpush1.msra.mxu0 0.0
    %1004 = vmatprep.subr.mxu0 0.0
    %1005 = vmatpush1.msra.mxu0 0.0
    %1006 = vmatprep.subr.mxu0 0.0
    %1007 = vmatpush1.msra.mxu0 0.0
    %1008 = vmatprep.subr.mxu0 0.0
    %1009 = vmatpush1.msra.mxu0 0.0
    %1010 = vmatprep.subr.mxu0 0.0
    %1011 = vmatpush1.msra.mxu0 0.0
    %1012 = vmatprep.subr.mxu0 0.0
    %1013 = vmatpush1.msra.mxu0 0.0
    %1014 = vmatprep.subr.mxu0 0.0
    %1015 = vmatpush1.msra.mxu0 0.0
    %1016 = vmatprep.subr.mxu0 0.0
    %1017 = vmatpush1.msra.mxu0 0.0
    %1018 = vmatprep.subr.mxu0 0.0
    %1019 = vmatpush1.msra.mxu0 0.0
    %1020 = vmatprep.subr.mxu0 0.0
    %1021 = vmatpush1.msra.mxu0 0.0
    %1022 = vmatprep.subr.mxu0 0.0
    %1023 = vmatpush1.msra.mxu0 0.0
    %1024 = vmatprep.subr.mxu0 0.0
    %1025 = vmatpush1.msra.mxu0 0.0
    %1026 = vmatprep.subr.mxu0 0.0
    %1027 = vmatpush1.msra.mxu0 0.0
    %1028 = vmatprep.subr.mxu0 0.0
    %1029 = vmatpush1.msra.mxu0 0.0
    %1030 = vmatprep.subr.mxu0 0.0
    %1031 = vmatpush1.msra.mxu0 0.0
    %1032 = vmatprep.subr.mxu0 0.0
    %1033 = vmatpush1.msra.mxu0 0.0
    %1034 = vmatprep.subr.mxu0 0.0
    %1035 = vmatpush1.msra.mxu0 0.0
    %1036 = vmatprep.mubr.f32.mxu0 0.0
    %1037 = vmatmul.mubr.f32.gmra.mrb[0].mxu0 %v965
    %v1038 = vpop.f32.mrb[0].mxu0
    %v1039 = vadd.f32 %v874, %v1038
    %v1040 = vpop.f32.mrb[0].mxu0
    %1041 = vmatprep.mubr.f32.mxu0 0.0
    %1042 = vmatmul.mubr.f32.gmra.mrb[0].mxu0 %v968
    %v1043 = vpop.f32.mrb[0].mxu0
    %v1044 = vadd.f32 %v875, %v1043
    %v1045 = vpop.f32.mrb[0].mxu0
    %1046 = vdwg.mxu0
    %v1048 = vsel %vm69, %v45, 0
    %v1051 = vsel %vm69, %v46, 0
    %v1053 = vsel %vm886, %v839, 0
    %1055 = vmatprep.subr.mxu0 0.0
    %1056 = vmatpush1.msra.mxu0 %v832
    %1057 = vmatprep.subr.mxu0 0.0
    %1058 = vmatpush1.msra.mxu0 %v1053
    %1059 = vmatprep.subr.mxu0 0.0
    %1060 = vmatpush1.msra.mxu0 0.0
    %1061 = vmatprep.subr.mxu0 0.0
    %1062 = vmatpush1.msra.mxu0 0.0
    %1063 = vmatprep.subr.mxu0 0.0
    %1064 = vmatpush1.msra.mxu0 0.0
    %1065 = vmatprep.subr.mxu0 0.0
    %1066 = vmatpush1.msra.mxu0 0.0
    %1067 = vmatprep.subr.mxu0 0.0
    %1068 = vmatpush1.msra.mxu0 0.0
    %1069 = vmatprep.subr.mxu0 0.0
    %1070 = vmatpush1.msra.mxu0 0.0
    %1071 = vmatprep.subr.mxu0 0.0
    %1072 = vmatpush1.msra.mxu0 0.0
    %1073 = vmatprep.subr.mxu0 0.0
    %1074 = vmatpush1.msra.mxu0 0.0
    %1075 = vmatprep.subr.mxu0 0.0
    %1076 = vmatpush1.msra.mxu0 0.0
    %1077 = vmatprep.subr.mxu0 0.0
    %1078 = vmatpush1.msra.mxu0 0.0
    %1079 = vmatprep.subr.mxu0 0.0
    %1080 = vmatpush1.msra.mxu0 0.0
    %1081 = vmatprep.subr.mxu0 0.0
    %1082 = vmatpush1.msra.mxu0 0.0
    %1083 = vmatprep.subr.mxu0 0.0
    %1084 = vmatpush1.msra.mxu0 0.0
    %1085 = vmatprep.subr.mxu0 0.0
    %1086 = vmatpush1.msra.mxu0 0.0
    %1087 = vmatprep.subr.mxu0 0.0
    %1088 = vmatpush1.msra.mxu0 0.0
    %1089 = vmatprep.subr.mxu0 0.0
    %1090 = vmatpush1.msra.mxu0 0.0
    %1091 = vmatprep.subr.mxu0 0.0
    %1092 = vmatpush1.msra.mxu0 0.0
    %1093 = vmatprep.subr.mxu0 0.0
    %1094 = vmatpush1.msra.mxu0 0.0
    %1095 = vmatprep.subr.mxu0 0.0
    %1096 = vmatpush1.msra.mxu0 0.0
    %1097 = vmatprep.subr.mxu0 0.0
    %1098 = vmatpush1.msra.mxu0 0.0
    %1099 = vmatprep.subr.mxu0 0.0
    %1100 = vmatpush1.msra.mxu0 0.0
    %1101 = vmatprep.subr.mxu0 0.0
    %1102 = vmatpush1.msra.mxu0 0.0
    %1103 = vmatprep.subr.mxu0 0.0
    %1104 = vmatpush1.msra.mxu0 0.0
    %1105 = vmatprep.subr.mxu0 0.0
    %1106 = vmatpush1.msra.mxu0 0.0
    %1107 = vmatprep.subr.mxu0 0.0
    %1108 = vmatpush1.msra.mxu0 0.0
    %1109 = vmatprep.subr.mxu0 0.0
    %1110 = vmatpush1.msra.mxu0 0.0
    %1111 = vmatprep.subr.mxu0 0.0
    %1112 = vmatpush1.msra.mxu0 0.0
    %1113 = vmatprep.subr.mxu0 0.0
    %1114 = vmatpush1.msra.mxu0 0.0
    %1115 = vmatprep.subr.mxu0 0.0
    %1116 = vmatpush1.msra.mxu0 0.0
    %1117 = vmatprep.subr.mxu0 0.0
    %1118 = vmatpush1.msra.mxu0 0.0
    %1119 = vmatprep.mubr.f32.mxu0 0.0
    %1120 = vmatmul.mubr.f32.gmra.mrb[0].mxu0 %v1048
    %v1121 = vpop.f32.mrb[0].mxu0
    %v1122 = vadd.f32 %v876, %v1121
    %v1123 = vpop.f32.mrb[0].mxu0
    %1124 = vmatprep.mubr.f32.mxu0 0.0
    %1125 = vmatmul.mubr.f32.gmra.mrb[0].mxu0 %v1051
    %v1126 = vpop.f32.mrb[0].mxu0
    %v1127 = vadd.f32 %v877, %v1126
    %v1128 = vpop.f32.mrb[0].mxu0
    %1129 = vdwg.mxu0
    %v1131 = vsel %vm69, %v47, 0
    %v1134 = vsel %vm69, %v48, 0
    %v1136 = vsel %vm886, %v863, 0
    %1138 = vmatprep.subr.mxu0 0.0
    %1139 = vmatpush1.msra.mxu0 %v856
    %1140 = vmatprep.subr.mxu0 0.0
    %1141 = vmatpush1.msra.mxu0 %v1136
    %1142 = vmatprep.subr.mxu0 0.0
    %1143 = vmatpush1.msra.mxu0 0.0
    %1144 = vmatprep.subr.mxu0 0.0
    %1145 = vmatpush1.msra.mxu0 0.0
    %1146 = vmatprep.subr.mxu0 0.0
    %1147 = vmatpush1.msra.mxu0 0.0
    %1148 = vmatprep.subr.mxu0 0.0
    %1149 = vmatpush1.msra.mxu0 0.0
    %1150 = vmatprep.subr.mxu0 0.0
    %1151 = vmatpush1.msra.mxu0 0.0
    %1152 = vmatprep.subr.mxu0 0.0
    %1153 = vmatpush1.msra.mxu0 0.0
    %1154 = vmatprep.subr.mxu0 0.0
    %1155 = vmatpush1.msra.mxu0 0.0
    %1156 = vmatprep.subr.mxu0 0.0
    %1157 = vmatpush1.msra.mxu0 0.0
    %1158 = vmatprep.subr.mxu0 0.0
    %1159 = vmatpush1.msra.mxu0 0.0
    %1160 = vmatprep.subr.mxu0 0.0
    %1161 = vmatpush1.msra.mxu0 0.0
    %1162 = vmatprep.subr.mxu0 0.0
    %1163 = vmatpush1.msra.mxu0 0.0
    %1164 = vmatprep.subr.mxu0 0.0
    %1165 = vmatpush1.msra.mxu0 0.0
    %1166 = vmatprep.subr.mxu0 0.0
    %1167 = vmatpush1.msra.mxu0 0.0
    %1168 = vmatprep.subr.mxu0 0.0
    %1169 = vmatpush1.msra.mxu0 0.0
    %1170 = vmatprep.subr.mxu0 0.0
    %1171 = vmatpush1.msra.mxu0 0.0
    %1172 = vmatprep.subr.mxu0 0.0
    %1173 = vmatpush1.msra.mxu0 0.0
    %1174 = vmatprep.subr.mxu0 0.0
    %1175 = vmatpush1.msra.mxu0 0.0
    %1176 = vmatprep.subr.mxu0 0.0
    %1177 = vmatpush1.msra.mxu0 0.0
    %1178 = vmatprep.subr.mxu0 0.0
    %1179 = vmatpush1.msra.mxu0 0.0
    %1180 = vmatprep.subr.mxu0 0.0
    %1181 = vmatpush1.msra.mxu0 0.0
    %1182 = vmatprep.subr.mxu0 0.0
    %1183 = vmatpush1.msra.mxu0 0.0
    %1184 = vmatprep.subr.mxu0 0.0
    %1185 = vmatpush1.msra.mxu0 0.0
    %1186 = vmatprep.subr.mxu0 0.0
    %1187 = vmatpush1.msra.mxu0 0.0
    %1188 = vmatprep.subr.mxu0 0.0
    %1189 = vmatpush1.msra.mxu0 0.0
    %1190 = vmatprep.subr.mxu0 0.0
    %1191 = vmatpush1.msra.mxu0 0.0
    %1192 = vmatprep.subr.mxu0 0.0
    %1193 = vmatpush1.msra.mxu0 0.0
    %1194 = vmatprep.subr.mxu0 0.0
    %1195 = vmatpush1.msra.mxu0 0.0
    %1196 = vmatprep.subr.mxu0 0.0
    %1197 = vmatpush1.msra.mxu0 0.0
    %1198 = vmatprep.subr.mxu0 0.0
    %1199 = vmatpush1.msra.mxu0 0.0
    %1200 = vmatprep.subr.mxu0 0.0
    %1201 = vmatpush1.msra.mxu0 0.0
    %1202 = vmatprep.mubr.f32.mxu0 0.0
    %1203 = vmatmul.mubr.f32.gmra.mrb[0].mxu0 %v1131
    %v1204 = vpop.f32.mrb[0].mxu0
    %v1205 = vadd.f32 %v878, %v1204
    %v1206 = vpop.f32.mrb[0].mxu0
    %1207 = vmatprep.mubr.f32.mxu0 0.0
    %1208 = vmatmul.mubr.f32.gmra.mrb[0].mxu0 %v1134
    %v1209 = vpop.f32.mrb[0].mxu0
    %v1210 = vadd.f32 %v879, %v1209
    %v1211 = vpop.f32.mrb[0].mxu0
    %1212 = vdwg.mxu0
    %v1213 = vmul.f32 %v956, %v143
    %v1214 = vmul.f32 %v961, %v144
    %v1215 = vmul.f32 %v1039, %v145
    %v1216 = vmul.f32 %v1044, %v146
    %v1217 = vmul.f32 %v1122, %v147
    %v1218 = vmul.f32 %v1127, %v148
    %v1219 = vmul.f32 %v1205, %v149
    %v1220 = vmul.f32 %v1210, %v150
    %v1221 = vld [vmem:[%s7] sm:$0x1]
    %v1222 = vlaneseq
    %v1223 = vshrl.u32 %v1222, 7
    %v1224 = vsub.s32 0, %v1223
    %v1225 = vrot.slane %v1221, %v1224
    %v1226 = vadd.f32 %v1213, %v1225
    %v1227 = vadd.f32 %v1214, %v1225
    %v1228 = vadd.f32 %v1215, %v1225
    %v1229 = vadd.f32 %v1216, %v1225
    %v1230 = vadd.f32 %v1217, %v1225
    %v1231 = vadd.f32 %v1218, %v1225
    %v1232 = vadd.f32 %v1219, %v1225
    %v1233 = vadd.f32 %v1220, %v1225
    %vm1234 = vcmask 130048
    %v1235 = vsel %vm1234, %v1226, 0.0
    %vm1236 = vcmask 123904
    %v1237 = vsel %vm1236, %v1227, 0.0
    %v1238 = vadd.f32 %v1235, %v1237
    %v1239 = vrot.slane %v1238, 4
    %v1240 = vadd.f32 %v1238, %v1239
    %v1241 = vrot.slane %v1240, 2
    %v1242 = vadd.f32 %v1240, %v1241
    %v1243 = vrot.slane %v1242, 1
    %v1244 = vadd.f32 %v1242, %v1243
    %v1245 = vsel %vm1234, %v1228, 0.0
    %v1246 = vsel %vm1236, %v1229, 0.0
    %v1247 = vadd.f32 %v1245, %v1246
    %v1248 = vrot.slane %v1247, 4
    %v1249 = vadd.f32 %v1247, %v1248
    %v1250 = vrot.slane %v1249, 2
    %v1251 = vadd.f32 %v1249, %v1250
    %v1252 = vrot.slane %v1251, 1
    %v1253 = vadd.f32 %v1251, %v1252
    %v1254 = vsel %vm1234, %v1230, 0.0
    %v1255 = vsel %vm1236, %v1231, 0.0
    %v1256 = vadd.f32 %v1254, %v1255
    %v1257 = vrot.slane %v1256, 4
    %v1258 = vadd.f32 %v1256, %v1257
    %v1259 = vrot.slane %v1258, 2
    %v1260 = vadd.f32 %v1258, %v1259
    %v1261 = vrot.slane %v1260, 1
    %v1262 = vadd.f32 %v1260, %v1261
    %v1263 = vsel %vm1234, %v1232, 0.0
    %v1264 = vsel %vm1236, %v1233, 0.0
    %v1265 = vadd.f32 %v1263, %v1264
    %v1266 = vrot.slane %v1265, 4
    %v1267 = vadd.f32 %v1265, %v1266
    %v1268 = vrot.slane %v1267, 2
    %v1269 = vadd.f32 %v1267, %v1268
    %v1270 = vrot.slane %v1269, 1
    %v1271 = vadd.f32 %v1269, %v1270
    %v1272 = vld [vmem:[%s7 + $0x1] sm:$0x1]
    %v1273 = vlaneseq
    %v1274 = vshrl.u32 %v1273, 7
    %v1275 = vsub.s32 0, %v1274
    %v1276 = vrot.slane %v1272, %v1275
    %v1277 = vmul.f32 %v1244, %v1276
    %v1278 = vmul.f32 %v1253, %v1276
    %v1279 = vmul.f32 %v1262, %v1276
    %v1280 = vmul.f32 %v1271, %v1276
    %v1281 = vld [vmem:[%s7 + $0x2] sm:$0x1]
    %v1282 = vlaneseq
    %v1283 = vshrl.u32 %v1282, 7
    %v1284 = vsub.s32 0, %v1283
    %v1285 = vrot.slane %v1281, %v1284
    %v1286 = vadd.f32 %v1277, %v1285
    %v1287 = vadd.f32 %v1278, %v1285
    %v1288 = vadd.f32 %v1279, %v1285
    %v1289 = vadd.f32 %v1280, %v1285
    %v1290 = vld [vmem:[%s7 + $0x3] sm:$0x1]
    %1292 = vset.pattern.permute.xlu0 0
    %1293 = vperm.xlu0 %1292, %v49
    %v1294 = vpop.permute.xlu0 %1293
    %v1296 = vlaneseq
    %v1297 = vshrl.u32 %v1296, 7
    %v1298 = vsub.s32 0, %v1297
    %v1299 = vrot.slane %v1290, %v1298
    %v1300 = vmul.f32 %v1294, %v1299
    %v1301 = vld [vmem:[%s7 + $0x4] sm:$0x1]
    %v1302 = vlaneseq
    %v1303 = vshrl.u32 %v1302, 7
    %v1304 = vsub.s32 0, %v1303
    %v1305 = vrot.slane %v1301, %v1304
    %v1306 = vadd.f32 %v1300, %v1305
    %v1307 = vxor.u32 %v1306, 2147483648
    %v1308 = vmul.f32 %v1307, 1.442695
    %v1309 = vpow.pop %v1308
    %v1310 = vadd.f32 %v1309, 1.0
    %v1311 = vrcp.pop %v1310
    %v1312 = vmul.f32 1.0, %v1311
    %v1313 = vld [vmem:[%s4] sm:$0xff]
    %v1314 = vld [vmem:[%s4 + $0x8] sm:$0xff]
    %v1315 = vld [vmem:[%s7 + $0x5] sm:$0x1]
    %v1316 = vlaneseq
    %v1317 = vshrl.u32 %v1316, 7
    %v1318 = vsub.s32 0, %v1317
    %v1319 = vrot.slane %v1315, %v1318
    %v1320 = vmul.f32 %v1294, %v1319
    %v1325 = vrot.slane %v1287, 7
    %vm1326 = vcmask 1041409
    %v1327 = vsel %vm1326, %v1325, %v1286
    %v1328 = vrot.slane %v1288, 6
    %vm1329 = vcmask 1042434
    %v1330 = vsel %vm1329, %v1328, %v1327
    %v1331 = vrot.slane %v1289, 5
    %vm1332 = vcmask 1043459
    %v1333 = vsel %vm1332, %v1331, %v1330
    %v1334 = vsel %vm1234, %v1333, 0
    %1336 = vmatprep.subr.mxu0 0.0
    %1337 = vmatpush1.msra.mxu0 %v1313
    %1338 = vmatprep.subr.mxu0 0.0
    %1339 = vmatpush1.msra.mxu0 %v1314
    %1340 = vmatprep.subr.mxu0 0.0
    %1341 = vmatpush1.msra.mxu0 0.0
    %1342 = vmatprep.subr.mxu0 0.0
    %1343 = vmatpush1.msra.mxu0 0.0
    %1344 = vmatprep.subr.mxu0 0.0
    %1345 = vmatpush1.msra.mxu0 0.0
    %1346 = vmatprep.subr.mxu0 0.0
    %1347 = vmatpush1.msra.mxu0 0.0
    %1348 = vmatprep.subr.mxu0 0.0
    %1349 = vmatpush1.msra.mxu0 0.0
    %1350 = vmatprep.subr.mxu0 0.0
    %1351 = vmatpush1.msra.mxu0 0.0
    %1352 = vmatprep.subr.mxu0 0.0
    %1353 = vmatpush1.msra.mxu0 0.0
    %1354 = vmatprep.subr.mxu0 0.0
    %1355 = vmatpush1.msra.mxu0 0.0
    %1356 = vmatprep.subr.mxu0 0.0
    %1357 = vmatpush1.msra.mxu0 0.0
    %1358 = vmatprep.subr.mxu0 0.0
    %1359 = vmatpush1.msra.mxu0 0.0
    %1360 = vmatprep.subr.mxu0 0.0
    %1361 = vmatpush1.msra.mxu0 0.0
    %1362 = vmatprep.subr.mxu0 0.0
    %1363 = vmatpush1.msra.mxu0 0.0
    %1364 = vmatprep.subr.mxu0 0.0
    %1365 = vmatpush1.msra.mxu0 0.0
    %1366 = vmatprep.subr.mxu0 0.0
    %1367 = vmatpush1.msra.mxu0 0.0
    %1368 = vmatprep.subr.mxu0 0.0
    %1369 = vmatpush1.msra.mxu0 0.0
    %1370 = vmatprep.subr.mxu0 0.0
    %1371 = vmatpush1.msra.mxu0 0.0
    %1372 = vmatprep.subr.mxu0 0.0
    %1373 = vmatpush1.msra.mxu0 0.0
    %1374 = vmatprep.subr.mxu0 0.0
    %1375 = vmatpush1.msra.mxu0 0.0
    %1376 = vmatprep.subr.mxu0 0.0
    %1377 = vmatpush1.msra.mxu0 0.0
    %1378 = vmatprep.subr.mxu0 0.0
    %1379 = vmatpush1.msra.mxu0 0.0
    %1380 = vmatprep.subr.mxu0 0.0
    %1381 = vmatpush1.msra.mxu0 0.0
    %1382 = vmatprep.subr.mxu0 0.0
    %1383 = vmatpush1.msra.mxu0 0.0
    %1384 = vmatprep.subr.mxu0 0.0
    %1385 = vmatpush1.msra.mxu0 0.0
    %1386 = vmatprep.subr.mxu0 0.0
    %1387 = vmatpush1.msra.mxu0 0.0
    %1388 = vmatprep.subr.mxu0 0.0
    %1389 = vmatpush1.msra.mxu0 0.0
    %1390 = vmatprep.subr.mxu0 0.0
    %1391 = vmatpush1.msra.mxu0 0.0
    %1392 = vmatprep.subr.mxu0 0.0
    %1393 = vmatpush1.msra.mxu0 0.0
    %1394 = vmatprep.subr.mxu0 0.0
    %1395 = vmatpush1.msra.mxu0 0.0
    %1396 = vmatprep.subr.mxu0 0.0
    %1397 = vmatpush1.msra.mxu0 0.0
    %1398 = vmatprep.subr.mxu0 0.0
    %1399 = vmatpush1.msra.mxu0 0.0
    %1400 = vmatprep.mubr.f32.mxu0 0.0
    %1401 = vmatmul.mubr.f32.gmra.mrb[0].mxu0 %v1334
    %v1402 = vpop.f32.mrb[0].mxu0
    %v1403 = vadd.f32 %v1320, %v1402
    %v1404 = vpop.f32.mrb[0].mxu0
    %1405 = vdwg.mxu0
    %v1406 = vld [vmem:[%s7 + $0x6] sm:$0x1]
    %1407 = vset.pattern.permute.xlu0 1
    %1408 = vperm.xlu0 %1407, %v49
    %v1409 = vpop.permute.xlu0 %1408
    %v1411 = vlaneseq
    %v1412 = vshrl.u32 %v1411, 7
    %v1413 = vsub.s32 0, %v1412
    %v1414 = vrot.slane %v1406, %v1413
    %v1415 = vmul.f32 %v1409, %v1414
    %v1416 = vadd.f32 %v1403, %v1415
    %v1417 = vld [vmem:[%s7 + $0x7] sm:$0x1]
    %v1418 = vlaneseq
    %v1419 = vshrl.u32 %v1418, 7
    %v1420 = vsub.s32 0, %v1419
    %v1421 = vrot.slane %v1417, %v1420
    %v1422 = vadd.f32 %v1416, %v1421
    %v1423 = vmax.f32 %v1422, 0.0
    %v1424 = vxor.u32 %v1423, 2147483648
    %v1425 = vmul.f32 %v1424, 1.442695
    %v1426 = vpow.pop %v1425
    %v1427 = vadd.f32 %v1426, 1.0
    %v1428 = vrcp.pop %v1427
    %v1429 = vmul.f32 1.0, %v1428
    %v1430 = vld [vmem:[%s5] sm:$0xff]
    %v1431 = vld [vmem:[%s5 + $0x8] sm:$0xff]
    %v1432 = vld [vmem:[%s7 + $0x8] sm:$0x1]
    %v1433 = vlaneseq
    %v1434 = vshrl.u32 %v1433, 7
    %v1435 = vsub.s32 0, %v1434
    %v1436 = vrot.slane %v1432, %v1435
    %v1437 = vmul.f32 %v1294, %v1436
    %v1439 = vsel %vm1234, %v1423, 0
    %1441 = vmatprep.subr.mxu0 0.0
    %1442 = vmatpush1.msra.mxu0 %v1430
    %1443 = vmatprep.subr.mxu0 0.0
    %1444 = vmatpush1.msra.mxu0 %v1431
    %1445 = vmatprep.subr.mxu0 0.0
    %1446 = vmatpush1.msra.mxu0 0.0
    %1447 = vmatprep.subr.mxu0 0.0
    %1448 = vmatpush1.msra.mxu0 0.0
    %1449 = vmatprep.subr.mxu0 0.0
    %1450 = vmatpush1.msra.mxu0 0.0
    %1451 = vmatprep.subr.mxu0 0.0
    %1452 = vmatpush1.msra.mxu0 0.0
    %1453 = vmatprep.subr.mxu0 0.0
    %1454 = vmatpush1.msra.mxu0 0.0
    %1455 = vmatprep.subr.mxu0 0.0
    %1456 = vmatpush1.msra.mxu0 0.0
    %1457 = vmatprep.subr.mxu0 0.0
    %1458 = vmatpush1.msra.mxu0 0.0
    %1459 = vmatprep.subr.mxu0 0.0
    %1460 = vmatpush1.msra.mxu0 0.0
    %1461 = vmatprep.subr.mxu0 0.0
    %1462 = vmatpush1.msra.mxu0 0.0
    %1463 = vmatprep.subr.mxu0 0.0
    %1464 = vmatpush1.msra.mxu0 0.0
    %1465 = vmatprep.subr.mxu0 0.0
    %1466 = vmatpush1.msra.mxu0 0.0
    %1467 = vmatprep.subr.mxu0 0.0
    %1468 = vmatpush1.msra.mxu0 0.0
    %1469 = vmatprep.subr.mxu0 0.0
    %1470 = vmatpush1.msra.mxu0 0.0
    %1471 = vmatprep.subr.mxu0 0.0
    %1472 = vmatpush1.msra.mxu0 0.0
    %1473 = vmatprep.subr.mxu0 0.0
    %1474 = vmatpush1.msra.mxu0 0.0
    %1475 = vmatprep.subr.mxu0 0.0
    %1476 = vmatpush1.msra.mxu0 0.0
    %1477 = vmatprep.subr.mxu0 0.0
    %1478 = vmatpush1.msra.mxu0 0.0
    %1479 = vmatprep.subr.mxu0 0.0
    %1480 = vmatpush1.msra.mxu0 0.0
    %1481 = vmatprep.subr.mxu0 0.0
    %1482 = vmatpush1.msra.mxu0 0.0
    %1483 = vmatprep.subr.mxu0 0.0
    %1484 = vmatpush1.msra.mxu0 0.0
    %1485 = vmatprep.subr.mxu0 0.0
    %1486 = vmatpush1.msra.mxu0 0.0
    %1487 = vmatprep.subr.mxu0 0.0
    %1488 = vmatpush1.msra.mxu0 0.0
    %1489 = vmatprep.subr.mxu0 0.0
    %1490 = vmatpush1.msra.mxu0 0.0
    %1491 = vmatprep.subr.mxu0 0.0
    %1492 = vmatpush1.msra.mxu0 0.0
    %1493 = vmatprep.subr.mxu0 0.0
    %1494 = vmatpush1.msra.mxu0 0.0
    %1495 = vmatprep.subr.mxu0 0.0
    %1496 = vmatpush1.msra.mxu0 0.0
    %1497 = vmatprep.subr.mxu0 0.0
    %1498 = vmatpush1.msra.mxu0 0.0
    %1499 = vmatprep.subr.mxu0 0.0
    %1500 = vmatpush1.msra.mxu0 0.0
    %1501 = vmatprep.subr.mxu0 0.0
    %1502 = vmatpush1.msra.mxu0 0.0
    %1503 = vmatprep.subr.mxu0 0.0
    %1504 = vmatpush1.msra.mxu0 0.0
    %1505 = vmatprep.mubr.f32.mxu0 0.0
    %1506 = vmatmul.mubr.f32.gmra.mrb[0].mxu0 %v1439
    %v1507 = vpop.f32.mrb[0].mxu0
    %v1508 = vadd.f32 %v1437, %v1507
    %v1509 = vpop.f32.mrb[0].mxu0
    %1510 = vdwg.mxu0
    %v1511 = vld [vmem:[%s7 + $0x9] sm:$0x1]
    %v1512 = vlaneseq
    %v1513 = vshrl.u32 %v1512, 7
    %v1514 = vsub.s32 0, %v1513
    %v1515 = vrot.slane %v1511, %v1514
    %v1516 = vmul.f32 %v1409, %v1515
    %v1517 = vadd.f32 %v1508, %v1516
    %v1518 = vld [vmem:[%s7 + $0xa] sm:$0x1]
    %v1519 = vlaneseq
    %v1520 = vshrl.u32 %v1519, 7
    %v1521 = vsub.s32 0, %v1520
    %v1522 = vrot.slane %v1518, %v1521
    %v1523 = vadd.f32 %v1517, %v1522
    %v1524 = vmax.f32 %v1523, 0.0
    %v1525 = vld [vmem:[%s6] sm:$0xff]
    %v1526 = vld [vmem:[%s6 + $0x8] sm:$0xff]
    %v1527 = vld [vmem:[%s6 + $0x10] sm:$0xff]
    %v1528 = vld [vmem:[%s6 + $0x18] sm:$0xff]
    %v1529 = vld [vmem:[%s7 + $0xb] sm:$0x1]
    %v1530 = vlaneseq
    %v1531 = vshrl.u32 %v1530, 7
    %v1532 = vsub.s32 0, %v1531
    %v1533 = vrot.slane %v1529, %v1532
    %vm1534 = vcmask 261120
    %v1536 = vsel %vm1534, %v1524, 0
    %1538 = vmatprep.subr.mxu0 0.0
    %1539 = vmatpush1.msra.mxu0 %v1525
    %1540 = vmatprep.subr.mxu0 0.0
    %1541 = vmatpush1.msra.mxu0 %v1526
    %1542 = vmatprep.subr.mxu0 0.0
    %1543 = vmatpush1.msra.mxu0 %v1527
    %1544 = vmatprep.subr.mxu0 0.0
    %1545 = vmatpush1.msra.mxu0 %v1528
    %1546 = vmatprep.subr.mxu0 0.0
    %1547 = vmatpush1.msra.mxu0 0.0
    %1548 = vmatprep.subr.mxu0 0.0
    %1549 = vmatpush1.msra.mxu0 0.0
    %1550 = vmatprep.subr.mxu0 0.0
    %1551 = vmatpush1.msra.mxu0 0.0
    %1552 = vmatprep.subr.mxu0 0.0
    %1553 = vmatpush1.msra.mxu0 0.0
    %1554 = vmatprep.subr.mxu0 0.0
    %1555 = vmatpush1.msra.mxu0 0.0
    %1556 = vmatprep.subr.mxu0 0.0
    %1557 = vmatpush1.msra.mxu0 0.0
    %1558 = vmatprep.subr.mxu0 0.0
    %1559 = vmatpush1.msra.mxu0 0.0
    %1560 = vmatprep.subr.mxu0 0.0
    %1561 = vmatpush1.msra.mxu0 0.0
    %1562 = vmatprep.subr.mxu0 0.0
    %1563 = vmatpush1.msra.mxu0 0.0
    %1564 = vmatprep.subr.mxu0 0.0
    %1565 = vmatpush1.msra.mxu0 0.0
    %1566 = vmatprep.subr.mxu0 0.0
    %1567 = vmatpush1.msra.mxu0 0.0
    %1568 = vmatprep.subr.mxu0 0.0
    %1569 = vmatpush1.msra.mxu0 0.0
    %1570 = vmatprep.subr.mxu0 0.0
    %1571 = vmatpush1.msra.mxu0 0.0
    %1572 = vmatprep.subr.mxu0 0.0
    %1573 = vmatpush1.msra.mxu0 0.0
    %1574 = vmatprep.subr.mxu0 0.0
    %1575 = vmatpush1.msra.mxu0 0.0
    %1576 = vmatprep.subr.mxu0 0.0
    %1577 = vmatpush1.msra.mxu0 0.0
    %1578 = vmatprep.subr.mxu0 0.0
    %1579 = vmatpush1.msra.mxu0 0.0
    %1580 = vmatprep.subr.mxu0 0.0
    %1581 = vmatpush1.msra.mxu0 0.0
    %1582 = vmatprep.subr.mxu0 0.0
    %1583 = vmatpush1.msra.mxu0 0.0
    %1584 = vmatprep.subr.mxu0 0.0
    %1585 = vmatpush1.msra.mxu0 0.0
    %1586 = vmatprep.subr.mxu0 0.0
    %1587 = vmatpush1.msra.mxu0 0.0
    %1588 = vmatprep.subr.mxu0 0.0
    %1589 = vmatpush1.msra.mxu0 0.0
    %1590 = vmatprep.subr.mxu0 0.0
    %1591 = vmatpush1.msra.mxu0 0.0
    %1592 = vmatprep.subr.mxu0 0.0
    %1593 = vmatpush1.msra.mxu0 0.0
    %1594 = vmatprep.subr.mxu0 0.0
    %1595 = vmatpush1.msra.mxu0 0.0
    %1596 = vmatprep.subr.mxu0 0.0
    %1597 = vmatpush1.msra.mxu0 0.0
    %1598 = vmatprep.subr.mxu0 0.0
    %1599 = vmatpush1.msra.mxu0 0.0
    %1600 = vmatprep.subr.mxu0 0.0
    %1601 = vmatpush1.msra.mxu0 0.0
    %1602 = vmatprep.mubr.f32.mxu0 0.0
    %1603 = vmatmul.mubr.f32.gmra.mrb[0].mxu0 %v1536
    %v1604 = vpop.f32.mrb[0].mxu0
    %v1605 = vadd.f32 %v1533, %v1604
    %v1606 = vpop.f32.mrb[0].mxu0
    %1607 = vdwg.mxu0
    %v1608 = vmax.f32 %v1605, 0.0
    %1610 = vrot.lane.b32.xlu0 %v1306, 32
    %v1611 = vpop.permute.xlu0 %1610
    %1614 = vrot.lane.b32.xlu0 %v1312, 32
    %v1615 = vpop.permute.xlu0 %1614
    %v1617 = vsel %vm1234, %v1423, %v1429
    %v1618 = vsel %vm1534, %v1617, %v1611
    %vm1619 = vcmask 392192
    %v1620 = vsel %vm1619, %v1618, %v1615
    %vm1621 = vcmask 523264
    %v1622 = vsel %vm1621, %v1620, 0.0
    %1623 = vst [vmem:[#allocation2] sm:$0xf] %v1622
    %v1624 = vsel %vm1534, %v1608, 0.0
    %1625 = vst [vmem:[#allocation4] sm:$0xf] %v1624
    // Predicated region
    $region34: #{tpu_custom_call.1} parent=1 // pred_check
      _
    $region35: #{tpu_custom_call.1} parent=1 // pred_check_branch
      %1627 = sbr.rel (0) target = $region37
    $region36: #{tpu_custom_call.1} parent=1 // pred_region
      %s1629 = ssub.s32 64, 64
      %1630 = vsyncadd [#allocation3], %s1629
      %s1632 = sshll.u32 [#allocation2], 4
      %s1633 = int_to_ptr.vmem [resolvable:$true] %s1632
      %1635 = dma.vmem_to_hbm [thread:$0]  %s1633, 64, %s8, [#allocation3]
    $region37: #{tpu_custom_call.1} parent=1 // pred_fallthru
      _
    // Predicated region
    $region38: #{tpu_custom_call.1} parent=1 // pred_check
      _
    $region39: #{tpu_custom_call.1} parent=1 // pred_check_branch
      %1637 = sbr.rel (0) target = $region41
    $region40: #{tpu_custom_call.1} parent=1 // pred_region
      %s1639 = ssub.s32 64, 64
      %1640 = vsyncadd [#allocation5], %s1639
      %s1642 = sshll.u32 [#allocation4], 4
      %s1643 = int_to_ptr.vmem [resolvable:$true] %s1642
      %1645 = dma.vmem_to_hbm [thread:$0]  %s1643, 64, %s9, [#allocation5]
    $region41: #{tpu_custom_call.1} parent=1 // pred_fallthru
      _
    // Predicated region
    $region42: #{tpu_custom_call.1} parent=1 // pred_check
      _
    $region43: #{tpu_custom_call.1} parent=1 // pred_check_branch
      %1647 = sbr.rel (0) target = $region45
    $region44: #{tpu_custom_call.1} parent=1 // pred_region
      %1648 = dma.done [#allocation3], 64
    $region45: #{tpu_custom_call.1} parent=1 // pred_fallthru
      _
    // Predicated region
    $region46: #{tpu_custom_call.1} parent=1 // pred_check
      _
    $region47: #{tpu_custom_call.1} parent=1 // pred_check_branch
      %1650 = sbr.rel (0) target = $region49
    $region48: #{tpu_custom_call.1} parent=1 // pred_region
      %1651 = dma.done [#allocation5], 64
    $region49: #{tpu_custom_call.1} parent=1 // pred_fallthru
      _
    %1652 = vsyncpa [#allocation3], 1
    %1653 = vsyncpa [#allocation5], 1

</llo_original>
